<compile_context>
chip_gen: v7x
topology: tpu7x:2x2x1
jax: 0.10.0
libtpu: 0.0.40
codegen_flags: <defaults>
</compile_context>

<pallas_src>
import math

import jax
import jax.numpy as jnp
from jax import lax
from jax.experimental import pallas as pl
from jax.experimental.pallas import tpu as pltpu


def _make_mha_kernel(*, scale, n_head, dk, use_mask, qkv_mode):
    """Builds the fused MHA kernel body for one batch element (all heads in-body)."""

    def kernel(*refs):
        i = 0
        if qkv_mode == "self":
            xq_ref = xk_ref = xv_ref = refs[0]
            i = 1
        elif qkv_mode == "kv_shared":
            xq_ref, xk_ref = refs[0], refs[1]
            xv_ref = xk_ref
            i = 2
        else:
            xq_ref, xk_ref, xv_ref = refs[0], refs[1], refs[2]
            i = 3
        wqkv_ref, bqkv_ref, wo_ref, bo_ref = refs[i], refs[i + 1], refs[i + 2], refs[i + 3]
        i += 4
        if use_mask:
            mask_ref = refs[i]
            i += 1
        out_ref = refs[i]

        xq = xq_ref[0]                                     # (S, E)
        xk = xk_ref[0]
        xv = xv_ref[0]

        # Full-width projections (one (E, D) matmul each; N = D, not dk).
        q = jnp.dot(xq, wqkv_ref[0], preferred_element_type=jnp.float32) + bqkv_ref[0]
        k = jnp.dot(xk, wqkv_ref[1], preferred_element_type=jnp.float32) + bqkv_ref[1]
        v = jnp.dot(xv, wqkv_ref[2], preferred_element_type=jnp.float32) + bqkv_ref[2]

        wo = wo_ref[...]                                   # (D, E)

        if use_mask:
            mask0 = mask_ref[0] == 0                       # (S, S) bool, shared by all heads

        acc = None
        # Statically unrolled head loop over lane slices of the projections.
        for h in range(n_head):
            sl = slice(h * dk, (h + 1) * dk)
            qh, kh, vh = q[:, sl], k[:, sl], v[:, sl]      # (S, dk)

            s = lax.dot_general(qh, kh, (((1,), (1,)), ((), ())),
                                preferred_element_type=jnp.float32) * scale   # (S, S)
            if use_mask:
                s = jnp.where(mask0, jnp.float32(-1e9), s)

            # softmax along keys (f32); divide moved to EUP reciprocal.
            m = jnp.max(s, axis=-1, keepdims=True)
            p = jnp.exp(s - m)
            p = p * pl.reciprocal(jnp.sum(p, axis=-1, keepdims=True), approx=True)
            # TODO(synk): nn.Dropout on attention probabilities is stochastic and
            # is the identity in eval/inference mode, so it is intentionally omitted.

            ctx_h = jnp.dot(p, vh, preferred_element_type=jnp.float32)        # (S, dk)
            # concat_h(ctx_h) @ Wo  ==  sum_h ctx_h @ Wo[h*dk:(h+1)*dk, :]
            contrib = jnp.dot(ctx_h, wo[sl, :], preferred_element_type=jnp.float32)
            acc = contrib if acc is None else acc + contrib

        out_ref[0] = (acc + bo_ref[...]).astype(out_ref.dtype)

    return kernel


def multi_head_attention_forward(query, key, value, params, *, n_head, mask=None):
    """query/key/value: (B, S, d_embed).  params: wq/wk/wv (E, D), bq/bk/bv (D,),
    wo (D, E), bo (E,).  Returns (B, S, d_embed)."""
    B, S, E = query.shape
    D = params["wq"].shape[1]
    assert D % n_head == 0, "d_model must be divisible by n_head"
    dk = D // n_head
    scale = 1.0 / math.sqrt(dk)

    # Packed weights/biases: fewer, larger operand DMAs per grid step.
    wqkv = jnp.stack([params["wq"], params["wk"], params["wv"]], axis=0)            # (3, E, D)
    bqkv = jnp.stack([params["bq"], params["bk"], params["bv"]], axis=0).reshape(3, 1, D)
    wo = params["wo"]                                                               # (D, E)
    bo = params["bo"].reshape(1, E)

    # Share activation operands when possible (self-attention / key==value).
    if key is query and value is query:
        qkv_mode, x_args = "self", [query]
    elif value is key:
        qkv_mode, x_args = "kv_shared", [query, key]
    else:
        qkv_mode, x_args = "qkv", [query, key, value]

    x_spec = pl.BlockSpec((1, S, E), lambda b: (b, 0, 0))
    in_specs = [x_spec] * len(x_args)
    in_specs += [
        pl.BlockSpec((3, E, D), lambda b: (0, 0, 0)),
        pl.BlockSpec((3, 1, D), lambda b: (0, 0, 0)),
        pl.BlockSpec((D, E), lambda b: (0, 0)),
        pl.BlockSpec((1, E), lambda b: (0, 0)),
    ]
    args = x_args + [wqkv, bqkv, wo, bo]

    use_mask = mask is not None
    if use_mask:
        if mask.ndim == 4:
            # A per-head mask (B, H>1, S, S) is not supported by this kernel.
            assert mask.shape[1] == 1, "per-head masks (H > 1) are not supported"
            mask = mask.reshape(mask.shape[0], S, S)
        elif mask.ndim == 2:
            mask = mask.reshape(1, S, S)
        Bm = mask.shape[0]
        assert Bm in (1, B), "mask batch dim must be 1 or B"
        mask = mask.astype(jnp.int8)     # small dtype; no wrapper-side batch broadcast
        if Bm == B:
            in_specs.append(pl.BlockSpec((1, S, S), lambda b: (b, 0, 0)))
        else:
            in_specs.append(pl.BlockSpec((1, S, S), lambda b: (0, 0, 0)))
        args.append(mask)

    # Advisory cost hint so XLA schedules/overlaps the custom call sensibly.
    flops = 2 * B * (3 * S * E * D + 2 * S * S * D + S * D * E)
    bytes_accessed = 4 * ((len(x_args) + 1) * B * S * E + 3 * E * D + 3 * D + D * E + E)
    if use_mask:
        bytes_accessed += int(mask.size)
    cost = pl.CostEstimate(flops=flops,
                           transcendentals=B * n_head * S * S,
                           bytes_accessed=bytes_accessed)

    kernel = _make_mha_kernel(scale=scale, n_head=n_head, dk=dk,
                              use_mask=use_mask, qkv_mode=qkv_mode)

    return pl.pallas_call(
        kernel,
        out_shape=jax.ShapeDtypeStruct((B, S, E), query.dtype),
        grid_spec=pltpu.PrefetchScalarGridSpec(
            num_scalar_prefetch=0,
            grid=(B,),                                    # batch only; heads folded in-body
            in_specs=in_specs,
            out_specs=pl.BlockSpec((1, S, E), lambda b: (b, 0, 0)),
        ),
        compiler_params=pltpu.CompilerParams(dimension_semantics=("parallel",)),
        cost_estimate=cost,
    )(*args)


def _reference_mha(query, key, value, params, *, n_head, mask=None):
    """Pure-JAX replica of MultiHeadAttentionLayer.forward (eval mode)."""
    B, S, E = query.shape
    D = params["wq"].shape[1]
    dk = D // n_head
    hp = lax.Precision.HIGHEST

    def proj(x, w, b):
        return jnp.dot(x, w, precision=hp) + b

    q = proj(query, params["wq"], params["bq"]).reshape(B, S, n_head, dk).transpose(0, 2, 1, 3)
    k = proj(key, params["wk"], params["bk"]).reshape(B, S, n_head, dk).transpose(0, 2, 1, 3)
    v = proj(value, params["wv"], params["bv"]).reshape(B, S, n_head, dk).transpose(0, 2, 1, 3)

    scores = jnp.einsum("bhqd,bhkd->bhqk", q, k, precision=hp) / math.sqrt(dk)
    if mask is not None:
        m = mask
        if m.ndim == 2:
            m = m[None, None]
        elif m.ndim == 3:
            m = m[:, None]
        scores = jnp.where(m == 0, -1e9, scores)
    p = jax.nn.softmax(scores, axis=-1)
    ctx = jnp.einsum("bhqk,bhkd->bhqd", p, v, precision=hp)
    ctx = ctx.transpose(0, 2, 1, 3).reshape(B, S, D)
    return jnp.dot(ctx, params["wo"], precision=hp) + params["bo"]


if __name__ == "__main__":
    # Small shapes consistent with the module: d_embed=32, d_model=32, n_head=4.
    B, S, d_embed, d_model, n_head = 2, 8, 32, 32, 4

    root = jax.random.PRNGKey(0)
    ks = jax.random.split(root, 12)
    wscale = 0.1

    query = jax.random.normal(ks[0], (B, S, d_embed), dtype=jnp.float32)
    key_x = jax.random.normal(ks[1], (B, S, d_embed), dtype=jnp.float32)
    value = jax.random.normal(ks[2], (B, S, d_embed), dtype=jnp.float32)

    params = {
        "wq": wscale * jax.random.normal(ks[3], (d_embed, d_model), jnp.float32),
        "bq": wscale * jax.random.normal(ks[4], (d_model,), jnp.float32),
        "wk": wscale * jax.random.normal(ks[5], (d_embed, d_model), jnp.float32),
        "bk": wscale * jax.random.normal(ks[6], (d_model,), jnp.float32),
        "wv": wscale * jax.random.normal(ks[7], (d_embed, d_model), jnp.float32),
        "bv": wscale * jax.random.normal(ks[8], (d_model,), jnp.float32),
        "wo": wscale * jax.random.normal(ks[9], (d_model, d_embed), jnp.float32),
        "bo": wscale * jax.random.normal(ks[10], (d_embed,), jnp.float32),
    }

    tol = dict(atol=2e-3, rtol=2e-3)   # approx EUP reciprocal in the softmax denom

    # 1) Cross-attention, no mask (distinct q/k/v operands).
    out = multi_head_attention_forward(query, key_x, value, params, n_head=n_head)
    out = jax.block_until_ready(out)
    ref = _reference_mha(query, key_x, value, params, n_head=n_head)
    assert out.shape == (B, S, d_embed)
    assert jnp.allclose(out, ref, **tol), "mismatch vs reference (no mask)"

    # 2) Causal mask passed as a single (S, S) int mask (no batch broadcast).
    causal = jnp.tril(jnp.ones((S, S), jnp.int32))
    out_m = multi_head_attention_forward(
        query, key_x, value, params, n_head=n_head, mask=causal)
    out_m = jax.block_until_ready(out_m)
    ref_m = _reference_mha(query, key_x, value, params, n_head=n_head, mask=causal)
    assert jnp.allclose(out_m, ref_m, **tol), "mismatch vs reference (mask)"

    # 3) Self-attention (query is key is value): shared-operand path.
    out_s = multi_head_attention_forward(query, query, query, params,
                                         n_head=n_head, mask=causal)
    out_s = jax.block_until_ready(out_s)
    ref_s = _reference_mha(query, query, query, params, n_head=n_head, mask=causal)
    assert jnp.allclose(out_s, ref_s, **tol), "mismatch vs reference (self-attention)"

    print("KERNEL_OK")
</pallas_src>

<mosaic_0001>
module attributes {stable_mosaic.version = 11 : i64} {
  func.func @kernel(%arg0: i32, %arg1: memref<1x8x32xf32, #tpu.memory_space<vmem>>, %arg2: memref<1x8x32xf32, #tpu.memory_space<vmem>>, %arg3: memref<1x8x32xf32, #tpu.memory_space<vmem>>, %arg4: memref<3x32x32xf32, #tpu.memory_space<vmem>>, %arg5: memref<3x1x32xf32, #tpu.memory_space<vmem>>, %arg6: memref<32x32xf32, #tpu.memory_space<vmem>>, %arg7: memref<1x32xf32, #tpu.memory_space<vmem>>, %arg8: memref<1x8x32xf32, #tpu.memory_space<vmem>>) attributes {dimension_semantics = [#tpu.dimension_semantics<parallel>], iteration_bounds = array<i64: 2>, scalar_prefetch = 0 : i64, scratch_operands = 0 : i64, tpu.core_type = #tpu.core_type<tc>, window_params = [{transform_indices = @transform_0, window_bounds = array<i64: 1, 8, 32>}, {transform_indices = @transform_1, window_bounds = array<i64: 1, 8, 32>}, {transform_indices = @transform_2, window_bounds = array<i64: 1, 8, 32>}, {pipeline_mode = #tpu.pipeline_mode<synchronous>, transform_indices = @transform_3, window_bounds = array<i64: 3, 32, 32>}, {pipeline_mode = #tpu.pipeline_mode<synchronous>, transform_indices = @transform_4, window_bounds = array<i64: 3, 1, 32>}, {pipeline_mode = #tpu.pipeline_mode<synchronous>, transform_indices = @transform_5, window_bounds = array<i64: 32, 32>}, {pipeline_mode = #tpu.pipeline_mode<synchronous>, transform_indices = @transform_6, window_bounds = array<i64: 1, 32>}, {transform_indices = @transform_7, window_bounds = array<i64: 1, 8, 32>}]} {
    %c0 = arith.constant 0 : index
    %c0_0 = arith.constant 0 : index
    %c0_1 = arith.constant 0 : index
    %0 = vector.load %arg1[%c0, %c0_0, %c0_1] : memref<1x8x32xf32, #tpu.memory_space<vmem>>, vector<1x8x32xf32>
    %1 = vector.shape_cast %0 : vector<1x8x32xf32> to vector<8x32xf32>
    %c0_2 = arith.constant 0 : index
    %c0_3 = arith.constant 0 : index
    %c0_4 = arith.constant 0 : index
    %2 = vector.load %arg2[%c0_2, %c0_3, %c0_4] : memref<1x8x32xf32, #tpu.memory_space<vmem>>, vector<1x8x32xf32>
    %3 = vector.shape_cast %2 : vector<1x8x32xf32> to vector<8x32xf32>
    %c0_5 = arith.constant 0 : index
    %c0_6 = arith.constant 0 : index
    %c0_7 = arith.constant 0 : index
    %4 = vector.load %arg3[%c0_5, %c0_6, %c0_7] : memref<1x8x32xf32, #tpu.memory_space<vmem>>, vector<1x8x32xf32>
    %5 = vector.shape_cast %4 : vector<1x8x32xf32> to vector<8x32xf32>
    %c0_8 = arith.constant 0 : index
    %c0_9 = arith.constant 0 : index
    %c0_10 = arith.constant 0 : index
    %6 = vector.load %arg4[%c0_8, %c0_9, %c0_10] : memref<3x32x32xf32, #tpu.memory_space<vmem>>, vector<1x32x32xf32>
    %7 = vector.shape_cast %6 : vector<1x32x32xf32> to vector<32x32xf32>
    %cst = arith.constant dense<0.000000e+00> : vector<8x32xf32>
    %8 = tpu.matmul %1, %7, %cst {dimension_numbers = #tpu.dot_dimension_numbers<[1], [0], [0], [1], [0, 0, 1, 1], [], []>} : vector<8x32xf32>, vector<32x32xf32>, vector<8x32xf32> -> vector<8x32xf32>
    %c0_11 = arith.constant 0 : index
    %c0_12 = arith.constant 0 : index
    %c0_13 = arith.constant 0 : index
    %9 = vector.load %arg5[%c0_11, %c0_12, %c0_13] : memref<3x1x32xf32, #tpu.memory_space<vmem>>, vector<1x1x32xf32>
    %10 = vector.shape_cast %9 : vector<1x1x32xf32> to vector<1x32xf32>
    %11 = vector.broadcast %10 : vector<1x32xf32> to vector<8x32xf32>
    %12 = arith.addf %8, %11 : vector<8x32xf32>
    %c1 = arith.constant 1 : index
    %c0_14 = arith.constant 0 : index
    %c0_15 = arith.constant 0 : index
    %13 = vector.load %arg4[%c1, %c0_14, %c0_15] : memref<3x32x32xf32, #tpu.memory_space<vmem>>, vector<1x32x32xf32>
    %14 = vector.shape_cast %13 : vector<1x32x32xf32> to vector<32x32xf32>
    %cst_16 = arith.constant dense<0.000000e+00> : vector<8x32xf32>
    %15 = tpu.matmul %3, %14, %cst_16 {dimension_numbers = #tpu.dot_dimension_numbers<[1], [0], [0], [1], [0, 0, 1, 1], [], []>} : vector<8x32xf32>, vector<32x32xf32>, vector<8x32xf32> -> vector<8x32xf32>
    %c1_17 = arith.constant 1 : index
    %c0_18 = arith.constant 0 : index
    %c0_19 = arith.constant 0 : index
    %16 = vector.load %arg5[%c1_17, %c0_18, %c0_19] : memref<3x1x32xf32, #tpu.memory_space<vmem>>, vector<1x1x32xf32>
    %17 = vector.shape_cast %16 : vector<1x1x32xf32> to vector<1x32xf32>
    %18 = vector.broadcast %17 : vector<1x32xf32> to vector<8x32xf32>
    %19 = arith.addf %15, %18 : vector<8x32xf32>
    %c2 = arith.constant 2 : index
    %c0_20 = arith.constant 0 : index
    %c0_21 = arith.constant 0 : index
    %20 = vector.load %arg4[%c2, %c0_20, %c0_21] : memref<3x32x32xf32, #tpu.memory_space<vmem>>, vector<1x32x32xf32>
    %21 = vector.shape_cast %20 : vector<1x32x32xf32> to vector<32x32xf32>
    %cst_22 = arith.constant dense<0.000000e+00> : vector<8x32xf32>
    %22 = tpu.matmul %5, %21, %cst_22 {dimension_numbers = #tpu.dot_dimension_numbers<[1], [0], [0], [1], [0, 0, 1, 1], [], []>} : vector<8x32xf32>, vector<32x32xf32>, vector<8x32xf32> -> vector<8x32xf32>
    %c2_23 = arith.constant 2 : index
    %c0_24 = arith.constant 0 : index
    %c0_25 = arith.constant 0 : index
    %23 = vector.load %arg5[%c2_23, %c0_24, %c0_25] : memref<3x1x32xf32, #tpu.memory_space<vmem>>, vector<1x1x32xf32>
    %24 = vector.shape_cast %23 : vector<1x1x32xf32> to vector<1x32xf32>
    %25 = vector.broadcast %24 : vector<1x32xf32> to vector<8x32xf32>
    %26 = arith.addf %22, %25 : vector<8x32xf32>
    %c0_26 = arith.constant 0 : index
    %c0_27 = arith.constant 0 : index
    %27 = vector.load %arg6[%c0_26, %c0_27] : memref<32x32xf32, #tpu.memory_space<vmem>>, vector<32x32xf32>
    %28 = vector.extract_strided_slice %12 {offsets = [0, 0], sizes = [8, 8], strides = [1, 1]} : vector<8x32xf32> to vector<8x8xf32>
    %29 = vector.extract_strided_slice %19 {offsets = [0, 0], sizes = [8, 8], strides = [1, 1]} : vector<8x32xf32> to vector<8x8xf32>
    %30 = vector.extract_strided_slice %26 {offsets = [0, 0], sizes = [8, 8], strides = [1, 1]} : vector<8x32xf32> to vector<8x8xf32>
    %cst_28 = arith.constant dense<0.000000e+00> : vector<8x8xf32>
    %31 = tpu.matmul %28, %29, %cst_28 {dimension_numbers = #tpu.dot_dimension_numbers<[1], [1], [0], [0], [0, 0, 1, 0], [], []>} : vector<8x8xf32>, vector<8x8xf32>, vector<8x8xf32> -> vector<8x8xf32>
    %cst_29 = arith.constant 0.353553385 : f32
    %32 = vector.broadcast %cst_29 : f32 to vector<8x8xf32>
    %33 = arith.mulf %31, %32 : vector<8x8xf32>
    %cst_30 = arith.constant dense<0xFF800000> : vector<8xf32>
    %34 = vector.multi_reduction <maximumf>, %33, %cst_30 [1] : vector<8x8xf32> to vector<8xf32>
    %35 = vector.shape_cast %34 : vector<8xf32> to vector<8x1xf32>
    %36 = vector.broadcast %35 : vector<8x1xf32> to vector<8x8xf32>
    %37 = arith.subf %33, %36 : vector<8x8xf32>
    %38 = math.exp %37 : vector<8x8xf32>
    %cst_31 = arith.constant dense<0.000000e+00> : vector<8xf32>
    %39 = vector.multi_reduction <add>, %38, %cst_31 [1] : vector<8x8xf32> to vector<8xf32>
    %40 = vector.shape_cast %39 : vector<8xf32> to vector<8x1xf32>
    %41 = tpu.reciprocal %40 {approx = true} : vector<8x1xf32> -> vector<8x1xf32>
    %42 = vector.broadcast %41 : vector<8x1xf32> to vector<8x8xf32>
    %43 = arith.mulf %38, %42 : vector<8x8xf32>
    %cst_32 = arith.constant dense<0.000000e+00> : vector<8x8xf32>
    %44 = tpu.matmul %43, %30, %cst_32 {dimension_numbers = #tpu.dot_dimension_numbers<[1], [0], [0], [1], [0, 0, 1, 1], [], []>} : vector<8x8xf32>, vector<8x8xf32>, vector<8x8xf32> -> vector<8x8xf32>
    %45 = vector.extract_strided_slice %27 {offsets = [0, 0], sizes = [8, 32], strides = [1, 1]} : vector<32x32xf32> to vector<8x32xf32>
    %cst_33 = arith.constant dense<0.000000e+00> : vector<8x32xf32>
    %46 = tpu.matmul %44, %45, %cst_33 {dimension_numbers = #tpu.dot_dimension_numbers<[1], [0], [0], [1], [0, 0, 1, 1], [], []>} : vector<8x8xf32>, vector<8x32xf32>, vector<8x32xf32> -> vector<8x32xf32>
    %47 = vector.extract_strided_slice %12 {offsets = [0, 8], sizes = [8, 8], strides = [1, 1]} : vector<8x32xf32> to vector<8x8xf32>
    %48 = vector.extract_strided_slice %19 {offsets = [0, 8], sizes = [8, 8], strides = [1, 1]} : vector<8x32xf32> to vector<8x8xf32>
    %49 = vector.extract_strided_slice %26 {offsets = [0, 8], sizes = [8, 8], strides = [1, 1]} : vector<8x32xf32> to vector<8x8xf32>
    %cst_34 = arith.constant dense<0.000000e+00> : vector<8x8xf32>
    %50 = tpu.matmul %47, %48, %cst_34 {dimension_numbers = #tpu.dot_dimension_numbers<[1], [1], [0], [0], [0, 0, 1, 0], [], []>} : vector<8x8xf32>, vector<8x8xf32>, vector<8x8xf32> -> vector<8x8xf32>
    %cst_35 = arith.constant 0.353553385 : f32
    %51 = vector.broadcast %cst_35 : f32 to vector<8x8xf32>
    %52 = arith.mulf %50, %51 : vector<8x8xf32>
    %cst_36 = arith.constant dense<0xFF800000> : vector<8xf32>
    %53 = vector.multi_reduction <maximumf>, %52, %cst_36 [1] : vector<8x8xf32> to vector<8xf32>
    %54 = vector.shape_cast %53 : vector<8xf32> to vector<8x1xf32>
    %55 = vector.broadcast %54 : vector<8x1xf32> to vector<8x8xf32>
    %56 = arith.subf %52, %55 : vector<8x8xf32>
    %57 = math.exp %56 : vector<8x8xf32>
    %cst_37 = arith.constant dense<0.000000e+00> : vector<8xf32>
    %58 = vector.multi_reduction <add>, %57, %cst_37 [1] : vector<8x8xf32> to vector<8xf32>
    %59 = vector.shape_cast %58 : vector<8xf32> to vector<8x1xf32>
    %60 = tpu.reciprocal %59 {approx = true} : vector<8x1xf32> -> vector<8x1xf32>
    %61 = vector.broadcast %60 : vector<8x1xf32> to vector<8x8xf32>
    %62 = arith.mulf %57, %61 : vector<8x8xf32>
    %cst_38 = arith.constant dense<0.000000e+00> : vector<8x8xf32>
    %63 = tpu.matmul %62, %49, %cst_38 {dimension_numbers = #tpu.dot_dimension_numbers<[1], [0], [0], [1], [0, 0, 1, 1], [], []>} : vector<8x8xf32>, vector<8x8xf32>, vector<8x8xf32> -> vector<8x8xf32>
    %64 = vector.extract_strided_slice %27 {offsets = [8, 0], sizes = [8, 32], strides = [1, 1]} : vector<32x32xf32> to vector<8x32xf32>
    %cst_39 = arith.constant dense<0.000000e+00> : vector<8x32xf32>
    %65 = tpu.matmul %63, %64, %cst_39 {dimension_numbers = #tpu.dot_dimension_numbers<[1], [0], [0], [1], [0, 0, 1, 1], [], []>} : vector<8x8xf32>, vector<8x32xf32>, vector<8x32xf32> -> vector<8x32xf32>
    %66 = arith.addf %46, %65 : vector<8x32xf32>
    %67 = vector.extract_strided_slice %12 {offsets = [0, 16], sizes = [8, 8], strides = [1, 1]} : vector<8x32xf32> to vector<8x8xf32>
    %68 = vector.extract_strided_slice %19 {offsets = [0, 16], sizes = [8, 8], strides = [1, 1]} : vector<8x32xf32> to vector<8x8xf32>
    %69 = vector.extract_strided_slice %26 {offsets = [0, 16], sizes = [8, 8], strides = [1, 1]} : vector<8x32xf32> to vector<8x8xf32>
    %cst_40 = arith.constant dense<0.000000e+00> : vector<8x8xf32>
    %70 = tpu.matmul %67, %68, %cst_40 {dimension_numbers = #tpu.dot_dimension_numbers<[1], [1], [0], [0], [0, 0, 1, 0], [], []>} : vector<8x8xf32>, vector<8x8xf32>, vector<8x8xf32> -> vector<8x8xf32>
    %cst_41 = arith.constant 0.353553385 : f32
    %71 = vector.broadcast %cst_41 : f32 to vector<8x8xf32>
    %72 = arith.mulf %70, %71 : vector<8x8xf32>
    %cst_42 = arith.constant dense<0xFF800000> : vector<8xf32>
    %73 = vector.multi_reduction <maximumf>, %72, %cst_42 [1] : vector<8x8xf32> to vector<8xf32>
    %74 = vector.shape_cast %73 : vector<8xf32> to vector<8x1xf32>
    %75 = vector.broadcast %74 : vector<8x1xf32> to vector<8x8xf32>
    %76 = arith.subf %72, %75 : vector<8x8xf32>
    %77 = math.exp %76 : vector<8x8xf32>
    %cst_43 = arith.constant dense<0.000000e+00> : vector<8xf32>
    %78 = vector.multi_reduction <add>, %77, %cst_43 [1] : vector<8x8xf32> to vector<8xf32>
    %79 = vector.shape_cast %78 : vector<8xf32> to vector<8x1xf32>
    %80 = tpu.reciprocal %79 {approx = true} : vector<8x1xf32> -> vector<8x1xf32>
    %81 = vector.broadcast %80 : vector<8x1xf32> to vector<8x8xf32>
    %82 = arith.mulf %77, %81 : vector<8x8xf32>
    %cst_44 = arith.constant dense<0.000000e+00> : vector<8x8xf32>
    %83 = tpu.matmul %82, %69, %cst_44 {dimension_numbers = #tpu.dot_dimension_numbers<[1], [0], [0], [1], [0, 0, 1, 1], [], []>} : vector<8x8xf32>, vector<8x8xf32>, vector<8x8xf32> -> vector<8x8xf32>
    %84 = vector.extract_strided_slice %27 {offsets = [16, 0], sizes = [8, 32], strides = [1, 1]} : vector<32x32xf32> to vector<8x32xf32>
    %cst_45 = arith.constant dense<0.000000e+00> : vector<8x32xf32>
    %85 = tpu.matmul %83, %84, %cst_45 {dimension_numbers = #tpu.dot_dimension_numbers<[1], [0], [0], [1], [0, 0, 1, 1], [], []>} : vector<8x8xf32>, vector<8x32xf32>, vector<8x32xf32> -> vector<8x32xf32>
    %86 = arith.addf %66, %85 : vector<8x32xf32>
    %87 = vector.extract_strided_slice %12 {offsets = [0, 24], sizes = [8, 8], strides = [1, 1]} : vector<8x32xf32> to vector<8x8xf32>
    %88 = vector.extract_strided_slice %19 {offsets = [0, 24], sizes = [8, 8], strides = [1, 1]} : vector<8x32xf32> to vector<8x8xf32>
    %89 = vector.extract_strided_slice %26 {offsets = [0, 24], sizes = [8, 8], strides = [1, 1]} : vector<8x32xf32> to vector<8x8xf32>
    %cst_46 = arith.constant dense<0.000000e+00> : vector<8x8xf32>
    %90 = tpu.matmul %87, %88, %cst_46 {dimension_numbers = #tpu.dot_dimension_numbers<[1], [1], [0], [0], [0, 0, 1, 0], [], []>} : vector<8x8xf32>, vector<8x8xf32>, vector<8x8xf32> -> vector<8x8xf32>
    %cst_47 = arith.constant 0.353553385 : f32
    %91 = vector.broadcast %cst_47 : f32 to vector<8x8xf32>
    %92 = arith.mulf %90, %91 : vector<8x8xf32>
    %cst_48 = arith.constant dense<0xFF800000> : vector<8xf32>
    %93 = vector.multi_reduction <maximumf>, %92, %cst_48 [1] : vector<8x8xf32> to vector<8xf32>
    %94 = vector.shape_cast %93 : vector<8xf32> to vector<8x1xf32>
    %95 = vector.broadcast %94 : vector<8x1xf32> to vector<8x8xf32>
    %96 = arith.subf %92, %95 : vector<8x8xf32>
    %97 = math.exp %96 : vector<8x8xf32>
    %cst_49 = arith.constant dense<0.000000e+00> : vector<8xf32>
    %98 = vector.multi_reduction <add>, %97, %cst_49 [1] : vector<8x8xf32> to vector<8xf32>
    %99 = vector.shape_cast %98 : vector<8xf32> to vector<8x1xf32>
    %100 = tpu.reciprocal %99 {approx = true} : vector<8x1xf32> -> vector<8x1xf32>
    %101 = vector.broadcast %100 : vector<8x1xf32> to vector<8x8xf32>
    %102 = arith.mulf %97, %101 : vector<8x8xf32>
    %cst_50 = arith.constant dense<0.000000e+00> : vector<8x8xf32>
    %103 = tpu.matmul %102, %89, %cst_50 {dimension_numbers = #tpu.dot_dimension_numbers<[1], [0], [0], [1], [0, 0, 1, 1], [], []>} : vector<8x8xf32>, vector<8x8xf32>, vector<8x8xf32> -> vector<8x8xf32>
    %104 = vector.extract_strided_slice %27 {offsets = [24, 0], sizes = [8, 32], strides = [1, 1]} : vector<32x32xf32> to vector<8x32xf32>
    %cst_51 = arith.constant dense<0.000000e+00> : vector<8x32xf32>
    %105 = tpu.matmul %103, %104, %cst_51 {dimension_numbers = #tpu.dot_dimension_numbers<[1], [0], [0], [1], [0, 0, 1, 1], [], []>} : vector<8x8xf32>, vector<8x32xf32>, vector<8x32xf32> -> vector<8x32xf32>
    %106 = arith.addf %86, %105 : vector<8x32xf32>
    %c0_52 = arith.constant 0 : index
    %c0_53 = arith.constant 0 : index
    %107 = vector.load %arg7[%c0_52, %c0_53] : memref<1x32xf32, #tpu.memory_space<vmem>>, vector<1x32xf32>
    %108 = vector.broadcast %107 : vector<1x32xf32> to vector<8x32xf32>
    %109 = arith.addf %106, %108 : vector<8x32xf32>
    %c0_54 = arith.constant 0 : index
    %c0_55 = arith.constant 0 : index
    %c0_56 = arith.constant 0 : index
    %110 = vector.load %arg8[%c0_54, %c0_55, %c0_56] : memref<1x8x32xf32, #tpu.memory_space<vmem>>, vector<1x8x32xf32>
    %111 = vector.shape_cast %110 : vector<1x8x32xf32> to vector<8x32xf32>
    %112 = vector.shape_cast %109 : vector<8x32xf32> to vector<1x8x32xf32>
    tpu.vector_store %arg8[%c0_54, %c0_55, %c0_56], %112 {strides = array<i32>} : memref<1x8x32xf32, #tpu.memory_space<vmem>>, vector<1x8x32xf32>,
    return
  }
  func.func @transform_0(%arg0: i32) -> (i32, i32, i32) {
    %c0_i32 = arith.constant 0 : i32
    %c0_i32_0 = arith.constant 0 : i32
    %c0_i32_1 = arith.constant 0 : i32
    return %arg0, %c0_i32, %c0_i32_0 : i32, i32, i32
  }
  func.func @transform_1(%arg0: i32) -> (i32, i32, i32) {
    %c0_i32 = arith.constant 0 : i32
    %c0_i32_0 = arith.constant 0 : i32
    %c0_i32_1 = arith.constant 0 : i32
    return %arg0, %c0_i32, %c0_i32_0 : i32, i32, i32
  }
  func.func @transform_2(%arg0: i32) -> (i32, i32, i32) {
    %c0_i32 = arith.constant 0 : i32
    %c0_i32_0 = arith.constant 0 : i32
    %c0_i32_1 = arith.constant 0 : i32
    return %arg0, %c0_i32, %c0_i32_0 : i32, i32, i32
  }
  func.func @transform_3(%arg0: i32) -> (i32, i32, i32) {
    %c0_i32 = arith.constant 0 : i32
    %c0_i32_0 = arith.constant 0 : i32
    %c0_i32_1 = arith.constant 0 : i32
    %c0_i32_2 = arith.constant 0 : i32
    return %c0_i32, %c0_i32_0, %c0_i32_1 : i32, i32, i32
  }
  func.func @transform_4(%arg0: i32) -> (i32, i32, i32) {
    %c0_i32 = arith.constant 0 : i32
    %c0_i32_0 = arith.constant 0 : i32
    %c0_i32_1 = arith.constant 0 : i32
    %c0_i32_2 = arith.constant 0 : i32
    return %c0_i32, %c0_i32_0, %c0_i32_1 : i32, i32, i32
  }
  func.func @transform_5(%arg0: i32) -> (i32, i32) {
    %c0_i32 = arith.constant 0 : i32
    %c0_i32_0 = arith.constant 0 : i32
    %c0_i32_1 = arith.constant 0 : i32
    return %c0_i32, %c0_i32_0 : i32, i32
  }
  func.func @transform_6(%arg0: i32) -> (i32, i32) {
    %c0_i32 = arith.constant 0 : i32
    %c0_i32_0 = arith.constant 0 : i32
    %c0_i32_1 = arith.constant 0 : i32
    return %c0_i32, %c0_i32_0 : i32, i32
  }
  func.func @transform_7(%arg0: i32) -> (i32, i32, i32) {
    %c0_i32 = arith.constant 0 : i32
    %c0_i32_0 = arith.constant 0 : i32
    %c0_i32_1 = arith.constant 0 : i32
    return %arg0, %c0_i32, %c0_i32_0 : i32, i32, i32
  }
}

</mosaic_0001>

<llo_original>
// kernel: tpu_custom_call.1
$region0: #{tpu_custom_call.1}
  #allocation0 [shape = 'u32[]', space=smem, size = 0x4, offset = 0x4, fixed_abs, tag = 'smem constant byte address 0x4 - core index']
  #allocation1 [shape = 'u32[144,128]{1,0:T(1,128)}', space=vmem, size = 0x12000, scoped, tag = 'internal scratch']
  %s0 = inlined_call_operand.hbm [shape: f32[2,8,32], index: 0, kind: input, shape index: {}]
  %s1 = inlined_call_operand.hbm [shape: f32[2,8,32], index: 1, kind: input, shape index: {}]
  %s2 = inlined_call_operand.hbm [shape: f32[2,8,32], index: 2, kind: input, shape index: {}]
  %s3 = inlined_call_operand.hbm [shape: f32[3,32,32], index: 3, kind: input, shape index: {}]
  %s4 = inlined_call_operand.vmem [shape: f32[3,1,32], index: 4, kind: input, shape index: {}]
  %s5 = inlined_call_operand.hbm [shape: f32[32,32], index: 5, kind: input, shape index: {}]
  %s6 = inlined_call_operand.vmem [shape: f32[1,32], index: 6, kind: input, shape index: {}]
  %s7 = inlined_call_operand.hbm [shape: f32[2,8,32], index: 7, kind: output, shape index: {}]
  %s8 = sld [smem:[#allocation0]]
  $region81: #{tpu_custom_call.1} parent=0
    _
  %s10 = ssub.s32 1, %s8
  %s11 = scalar_select 0, %s10, %s8
  $region1: #{tpu_custom_call.1} parent=0
    #allocation2 [shape = 'u8[8192]{0}', space=vmem, size = 0x2000, scoped, tag = 'input window, operand 0']
    #allocation3 [shape = 's32[2]{0}', space=sflag, size = 0x8, scoped, tag = 'scoped memory for tpu_custom_call.1']
    #allocation4 [shape = 's32[2]{0}', space=sflag, size = 0x8, scoped, tag = 'scoped memory for tpu_custom_call.1']
    #allocation5 [shape = 'u8[8192]{0}', space=vmem, size = 0x2000, scoped, tag = 'input window, operand 1']
    #allocation6 [shape = 's32[2]{0}', space=sflag, size = 0x8, scoped, tag = 'scoped memory for tpu_custom_call.1']
    #allocation7 [shape = 'u8[8192]{0}', space=vmem, size = 0x2000, scoped, tag = 'input window, operand 2']
    #allocation8 [shape = 'u8[49152]{0}', space=vmem, size = 0xc000, scoped, tag = 'input window, operand 3, single buffered']
    #allocation9 [shape = 's32[1]{0}', space=sflag, size = 0x4, scoped, tag = 'scoped memory for tpu_custom_call.1']
    #allocation10 [shape = 'u8[16384]{0}', space=vmem, size = 0x4000, scoped, tag = 'input window, operand 5, single buffered']
    #allocation11 [shape = 'u8[8192]{0}', space=vmem, size = 0x2000, scoped, tag = 'output window, operand 0']
    %12 = vsyncpa [#allocation3], 0
    %s13 = scalar_lea.sflag [#allocation3], 1
    %14 = vsyncpa %s13, 0
    %15 = vsyncpa [#allocation6], 0
    %s16 = scalar_lea.sflag [#allocation6], 1
    %17 = vsyncpa %s16, 0
    %18 = vsyncpa [#allocation9], 0
    %19 = vsyncpa [#allocation4], 0
    %s20 = scalar_lea.sflag [#allocation4], 1
    %21 = vsyncpa %s20, 0
    loop: start=0, step=1, limit=4
    $region2: #{tpu_custom_call.1} parent=1 // loop_pre_header
      _
    $region3: #{tpu_custom_call.1} parent=1 // loop_header
      %s23 = sphi 0, %s27
      %p24 = scmp.ge.s32.totalorder %s23, 4
      %s33 = sphi 0, %s35
      %s36 = sphi 0, %s33
      %s37 = sphi 0, %s36
      %s53 = sphi 0, %s37
      %s59 = sphi 0, %s61
      %s62 = sphi 0, %s59
      %s63 = sphi 0, %s62
      %s79 = sphi 0, %s63
      %s85 = sphi 0, %s87
      %s88 = sphi 0, %s85
      %s89 = sphi 0, %s88
      %s105 = sphi 0, %s89
      %s109 = sphi 0, %s109
      %s111 = sphi 0, %s109
      %s112 = sphi 0, %s111
      %s126 = sphi 0, %s112
      %s130 = sphi 0, %s130
      %s132 = sphi 0, %s130
      %s133 = sphi 0, %s132
      %s147 = sphi 0, %s133
      %s151 = sphi 0, %s151
      %s153 = sphi 0, %s151
      %s154 = sphi 0, %s153
      %s168 = sphi 0, %s154
      %s172 = sphi 0, %s172
      %s174 = sphi 0, %s172
      %s175 = sphi 0, %s174
      %s189 = sphi 0, %s175
      %s195 = sphi 0, %s197
      %s198 = sphi 0, %s195
      %s199 = sphi 0, %s198
      %s215 = sphi 0, %s199
    $region4: #{tpu_custom_call.1} parent=1 // loop_header_branch
      %26 = sbr.rel (%p24) target = $region8
    $region5: #{tpu_custom_call.1} parent=1 // loop_body
      %s28 = ssub.s32 %s23, 1
      %s29 = ssub.s32 %s23, 2
      %s30 = sadd.s32 %s23, 1
      %s31 = ssub.s32 %s23, %s30
      %p32 = scmp.eq.s32.totalorder %s31, 0
      %s34 = sadd.s32 %s33, 1
      %s35 = scalar_select %p32, %s33, %s34
      %p38 = pneg %p32
      %p39 = scmp.eq.s32.totalorder %s23, 1
      %p40 = por %p38, %p39
      %p41 = scmp.ne.s32.totalorder %s33, %s36
      %p42 = scmp.eq.s32.totalorder %s23, 0
      %p43 = por %p41, %p42
      %p44 = scmp.ne.s32.totalorder %s33, %s36
      %p45 = scmp.eq.s32.totalorder %s28, 1
      %p46 = por %p44, %p45
      %p47 = scmp.ne.s32.totalorder %s36, %s37
      %p48 = scmp.eq.s32.totalorder %s28, 0
      %p49 = por %p47, %p48
      %p50 = scmp.ne.s32.totalorder %s36, %s37
      %p51 = scmp.eq.s32.totalorder %s29, 1
      %p52 = por %p50, %p51
      %p54 = scmp.ne.s32.totalorder %s37, %s53
      %p55 = scmp.eq.s32.totalorder %s29, 0
      %p56 = por %p54, %p55
      %s57 = ssub.s32 %s23, %s30
      %p58 = scmp.eq.s32.totalorder %s57, 0
      %s60 = sadd.s32 %s59, 1
      %s61 = scalar_select %p58, %s59, %s60
      %p64 = pneg %p58
      %p65 = scmp.eq.s32.totalorder %s23, 1
      %p66 = por %p64, %p65
      %p67 = scmp.ne.s32.totalorder %s59, %s62
      %p68 = scmp.eq.s32.totalorder %s23, 0
      %p69 = por %p67, %p68
      %p70 = scmp.ne.s32.totalorder %s59, %s62
      %p71 = scmp.eq.s32.totalorder %s28, 1
      %p72 = por %p70, %p71
      %p73 = scmp.ne.s32.totalorder %s62, %s63
      %p74 = scmp.eq.s32.totalorder %s28, 0
      %p75 = por %p73, %p74
      %p76 = scmp.ne.s32.totalorder %s62, %s63
      %p77 = scmp.eq.s32.totalorder %s29, 1
      %p78 = por %p76, %p77
      %p80 = scmp.ne.s32.totalorder %s63, %s79
      %p81 = scmp.eq.s32.totalorder %s29, 0
      %p82 = por %p80, %p81
      %s83 = ssub.s32 %s23, %s30
      %p84 = scmp.eq.s32.totalorder %s83, 0
      %s86 = sadd.s32 %s85, 1
      %s87 = scalar_select %p84, %s85, %s86
      %p90 = pneg %p84
      %p91 = scmp.eq.s32.totalorder %s23, 1
      %p92 = por %p90, %p91
      %p93 = scmp.ne.s32.totalorder %s85, %s88
      %p94 = scmp.eq.s32.totalorder %s23, 0
      %p95 = por %p93, %p94
      %p96 = scmp.ne.s32.totalorder %s85, %s88
      %p97 = scmp.eq.s32.totalorder %s28, 1
      %p98 = por %p96, %p97
      %p99 = scmp.ne.s32.totalorder %s88, %s89
      %p100 = scmp.eq.s32.totalorder %s28, 0
      %p101 = por %p99, %p100
      %p102 = scmp.ne.s32.totalorder %s88, %s89
      %p103 = scmp.eq.s32.totalorder %s29, 1
      %p104 = por %p102, %p103
      %p106 = scmp.ne.s32.totalorder %s89, %s105
      %p107 = scmp.eq.s32.totalorder %s29, 0
      %p108 = por %p106, %p107
      %s110 = sadd.s32 %s109, 1
      %p113 = scmp.eq.s32.totalorder %s23, 1
      %p114 = scmp.ne.s32.totalorder %s109, %s111
      %p115 = scmp.eq.s32.totalorder %s23, 0
      %p116 = por %p114, %p115
      %p117 = scmp.ne.s32.totalorder %s109, %s111
      %p118 = scmp.eq.s32.totalorder %s28, 1
      %p119 = por %p117, %p118
      %p120 = scmp.ne.s32.totalorder %s111, %s112
      %p121 = scmp.eq.s32.totalorder %s28, 0
      %p122 = por %p120, %p121
      %p123 = scmp.ne.s32.totalorder %s111, %s112
      %p124 = scmp.eq.s32.totalorder %s29, 1
      %p125 = por %p123, %p124
      %p127 = scmp.ne.s32.totalorder %s112, %s126
      %p128 = scmp.eq.s32.totalorder %s29, 0
      %p129 = por %p127, %p128
      %s131 = sadd.s32 %s130, 1
      %p134 = scmp.eq.s32.totalorder %s23, 1
      %p135 = scmp.ne.s32.totalorder %s130, %s132
      %p136 = scmp.eq.s32.totalorder %s23, 0
      %p137 = por %p135, %p136
      %p138 = scmp.ne.s32.totalorder %s130, %s132
      %p139 = scmp.eq.s32.totalorder %s28, 1
      %p140 = por %p138, %p139
      %p141 = scmp.ne.s32.totalorder %s132, %s133
      %p142 = scmp.eq.s32.totalorder %s28, 0
      %p143 = por %p141, %p142
      %p144 = scmp.ne.s32.totalorder %s132, %s133
      %p145 = scmp.eq.s32.totalorder %s29, 1
      %p146 = por %p144, %p145
      %p148 = scmp.ne.s32.totalorder %s133, %s147
      %p149 = scmp.eq.s32.totalorder %s29, 0
      %p150 = por %p148, %p149
      %s152 = sadd.s32 %s151, 1
      %p155 = scmp.eq.s32.totalorder %s23, 1
      %p156 = scmp.ne.s32.totalorder %s151, %s153
      %p157 = scmp.eq.s32.totalorder %s23, 0
      %p158 = por %p156, %p157
      %p159 = scmp.ne.s32.totalorder %s151, %s153
      %p160 = scmp.eq.s32.totalorder %s28, 1
      %p161 = por %p159, %p160
      %p162 = scmp.ne.s32.totalorder %s153, %s154
      %p163 = scmp.eq.s32.totalorder %s28, 0
      %p164 = por %p162, %p163
      %p165 = scmp.ne.s32.totalorder %s153, %s154
      %p166 = scmp.eq.s32.totalorder %s29, 1
      %p167 = por %p165, %p166
      %p169 = scmp.ne.s32.totalorder %s154, %s168
      %p170 = scmp.eq.s32.totalorder %s29, 0
      %p171 = por %p169, %p170
      %s173 = sadd.s32 %s172, 1
      %p176 = scmp.eq.s32.totalorder %s23, 1
      %p177 = scmp.ne.s32.totalorder %s172, %s174
      %p178 = scmp.eq.s32.totalorder %s23, 0
      %p179 = por %p177, %p178
      %p180 = scmp.ne.s32.totalorder %s172, %s174
      %p181 = scmp.eq.s32.totalorder %s28, 1
      %p182 = por %p180, %p181
      %p183 = scmp.ne.s32.totalorder %s174, %s175
      %p184 = scmp.eq.s32.totalorder %s28, 0
      %p185 = por %p183, %p184
      %p186 = scmp.ne.s32.totalorder %s174, %s175
      %p187 = scmp.eq.s32.totalorder %s29, 1
      %p188 = por %p186, %p187
      %p190 = scmp.ne.s32.totalorder %s175, %s189
      %p191 = scmp.eq.s32.totalorder %s29, 0
      %p192 = por %p190, %p191
      %s193 = ssub.s32 %s23, %s30
      %p194 = scmp.eq.s32.totalorder %s193, 0
      %s196 = sadd.s32 %s195, 1
      %s197 = scalar_select %p194, %s195, %s196
      %p200 = pneg %p194
      %p201 = scmp.eq.s32.totalorder %s23, 1
      %p202 = por %p200, %p201
      %p203 = scmp.ne.s32.totalorder %s195, %s198
      %p204 = scmp.eq.s32.totalorder %s23, 0
      %p205 = por %p203, %p204
      %p206 = scmp.ne.s32.totalorder %s195, %s198
      %p207 = scmp.eq.s32.totalorder %s28, 1
      %p208 = por %p206, %p207
      %p209 = scmp.ne.s32.totalorder %s198, %s199
      %p210 = scmp.eq.s32.totalorder %s28, 0
      %p211 = por %p209, %p210
      %p212 = scmp.ne.s32.totalorder %s198, %s199
      %p213 = scmp.eq.s32.totalorder %s29, 1
      %p214 = por %p212, %p213
      %p216 = scmp.ne.s32.totalorder %s199, %s215
      %p217 = scmp.eq.s32.totalorder %s29, 0
      %p218 = por %p216, %p217
      %p219 = scmp.le.s32.totalorder 1, %s23
      %p220 = scmp.lt.s32.totalorder %s23, 3
      %p221 = pnand %p219, %p220
      %p222 = pneg %p221
      // Predicated region
      $region9: #{tpu_custom_call.1} parent=5 // pred_check
        _
      $region10: #{tpu_custom_call.1} parent=5 // pred_check_branch
        %224 = sbr.rel (%p221) target = $region12
      $region11: #{tpu_custom_call.1} parent=5 // pred_region
        %s225 = ssub.s32 %s23, 1
        // Predicated region
        $region13: #{tpu_custom_call.1} parent=11 // pred_check
          %p226 = pneg %p122
        $region14: #{tpu_custom_call.1} parent=11 // pred_check_branch
          %228 = sbr.rel (%p226) target = $region16
        $region15: #{tpu_custom_call.1} parent=11 // pred_region
          %s230 = ssub.s32 1536, 1536
          %231 = vsyncadd [#allocation9], %s230
          %s232 = sshll.u32 [#allocation8], 4
          %s233 = int_to_ptr.vmem [resolvable:$true] %s232
          %238 = dma.hbm_to_vmem [thread:$0]  %s3, 1536, %s233, [#allocation9], 128, 128, 8
        $region16: #{tpu_custom_call.1} parent=11 // pred_fallthru
          _
        // Predicated region
        $region17: #{tpu_custom_call.1} parent=11 // pred_check
          %p239 = pneg %p143
        $region18: #{tpu_custom_call.1} parent=11 // pred_check_branch
          %241 = sbr.rel (%p239) target = $region20
        $region19: #{tpu_custom_call.1} parent=11 // pred_region
          _
        $region20: #{tpu_custom_call.1} parent=11 // pred_fallthru
          _
        // Predicated region
        $region21: #{tpu_custom_call.1} parent=11 // pred_check
          %p242 = pneg %p164
        $region22: #{tpu_custom_call.1} parent=11 // pred_check_branch
          %244 = sbr.rel (%p242) target = $region24
        $region23: #{tpu_custom_call.1} parent=11 // pred_region
          %s246 = ssub.s32 512, 512
          %247 = vsyncadd [#allocation9], %s246
          %s248 = sshll.u32 [#allocation10], 4
          %s249 = int_to_ptr.vmem [resolvable:$true] %s248
          %254 = dma.hbm_to_vmem [thread:$0]  %s5, 512, %s249, [#allocation9], 128, 128, 8
        $region24: #{tpu_custom_call.1} parent=11 // pred_fallthru
          _
        // Predicated region
        $region25: #{tpu_custom_call.1} parent=11 // pred_check
          %p255 = pneg %p185
        $region26: #{tpu_custom_call.1} parent=11 // pred_check_branch
          %257 = sbr.rel (%p255) target = $region28
        $region27: #{tpu_custom_call.1} parent=11 // pred_region
          _
        $region28: #{tpu_custom_call.1} parent=11 // pred_fallthru
          _
      $region12: #{tpu_custom_call.1} parent=5 // pred_fallthru
        _
      %p258 = scmp.lt.s32.totalorder %s23, 2
      // Predicated region
      $region29: #{tpu_custom_call.1} parent=5 // pred_check
        %p259 = pneg %p258
      $region30: #{tpu_custom_call.1} parent=5 // pred_check_branch
        %261 = sbr.rel (%p259) target = $region32
      $region31: #{tpu_custom_call.1} parent=5 // pred_region
        // Predicated region
        $region33: #{tpu_custom_call.1} parent=31 // pred_check
          %p262 = pneg %p43
        $region34: #{tpu_custom_call.1} parent=31 // pred_check_branch
          %264 = sbr.rel (%p262) target = $region36
        $region35: #{tpu_custom_call.1} parent=31 // pred_region
          %s265 = sand.u32 %s33, 1
          %s266 = scalar_lea.sflag [#allocation3], %s265
          %s267 = sand.u32 %s33, 1
          %s268 = smul.addr %s267, 8
          %s269 = scalar_lea.vmem [#allocation2], %s268
          %s271 = ssub.s32 128, 128
          %272 = vsyncadd %s266, %s271
          %s273 = smul.addr %s23, 128
          %s274 = scalar_lea.hbm %s0, %s273
          %s276 = sshll.u32 %s269, 4
          %s277 = int_to_ptr.vmem [resolvable:$true] %s276
          %279 = dma.hbm_to_vmem [thread:$0]  %s274, 128, %s277, %s266
        $region36: #{tpu_custom_call.1} parent=31 // pred_fallthru
          _
        // Predicated region
        $region37: #{tpu_custom_call.1} parent=31 // pred_check
          %p280 = pneg %p69
        $region38: #{tpu_custom_call.1} parent=31 // pred_check_branch
          %282 = sbr.rel (%p280) target = $region40
        $region39: #{tpu_custom_call.1} parent=31 // pred_region
          %s283 = sand.u32 %s23, 1
          %s284 = scalar_lea.sflag [#allocation6], %s283
          %s285 = sand.u32 %s59, 1
          %s286 = smul.addr %s285, 8
          %s287 = scalar_lea.vmem [#allocation5], %s286
          %s289 = ssub.s32 128, 128
          %290 = vsyncadd %s284, %s289
          %s291 = smul.addr %s23, 128
          %s292 = scalar_lea.hbm %s1, %s291
          %s294 = sshll.u32 %s287, 4
          %s295 = int_to_ptr.vmem [resolvable:$true] %s294
          %297 = dma.hbm_to_vmem [thread:$0]  %s292, 128, %s295, %s284
        $region40: #{tpu_custom_call.1} parent=31 // pred_fallthru
          _
        // Predicated region
        $region41: #{tpu_custom_call.1} parent=31 // pred_check
          %p298 = pneg %p95
        $region42: #{tpu_custom_call.1} parent=31 // pred_check_branch
          %300 = sbr.rel (%p298) target = $region44
        $region43: #{tpu_custom_call.1} parent=31 // pred_region
          %s301 = sand.u32 %s23, 1
          %s302 = scalar_lea.sflag [#allocation6], %s301
          %s303 = sand.u32 %s85, 1
          %s304 = smul.addr %s303, 8
          %s305 = scalar_lea.vmem [#allocation7], %s304
          %s307 = ssub.s32 128, 128
          %308 = vsyncadd %s302, %s307
          %s309 = smul.addr %s23, 128
          %s310 = scalar_lea.hbm %s2, %s309
          %s312 = sshll.u32 %s305, 4
          %s313 = int_to_ptr.vmem [resolvable:$true] %s312
          %315 = dma.hbm_to_vmem [thread:$0]  %s310, 128, %s313, %s302
        $region44: #{tpu_custom_call.1} parent=31 // pred_fallthru
          _
      $region32: #{tpu_custom_call.1} parent=5 // pred_fallthru
        _
      %p316 = scmp.le.s32.totalorder 1, %s23
      %p317 = scmp.lt.s32.totalorder %s23, 3
      %p318 = pnand %p316, %p317
      %p319 = pneg %p318
      // Predicated region
      $region45: #{tpu_custom_call.1} parent=5 // pred_check
        _
      $region46: #{tpu_custom_call.1} parent=5 // pred_check_branch
        %321 = sbr.rel (%p318) target = $region48
      $region47: #{tpu_custom_call.1} parent=5 // pred_region
        %s322 = ssub.s32 %s23, 1
        %s323 = sand.u32 %s36, 1
        %s324 = scalar_lea.sflag [#allocation3], %s323
        %s325 = sand.u32 %s36, 1
        %s326 = smul.addr %s325, 8
        %s327 = scalar_lea.vmem [#allocation2], %s326
        // Predicated region
        $region49: #{tpu_custom_call.1} parent=47 // pred_check
          %p328 = pneg %p49
        $region50: #{tpu_custom_call.1} parent=47 // pred_check_branch
          %330 = sbr.rel (%p328) target = $region52
        $region51: #{tpu_custom_call.1} parent=47 // pred_region
          %331 = dma.done %s324, 128
        $region52: #{tpu_custom_call.1} parent=47 // pred_fallthru
          _
        %s332 = sand.u32 %s28, 1
        %s333 = scalar_lea.sflag [#allocation6], %s332
        %s334 = sand.u32 %s62, 1
        %s335 = smul.addr %s334, 8
        %s336 = scalar_lea.vmem [#allocation5], %s335
        // Predicated region
        $region53: #{tpu_custom_call.1} parent=47 // pred_check
          %p337 = pneg %p75
        $region54: #{tpu_custom_call.1} parent=47 // pred_check_branch
          %339 = sbr.rel (%p337) target = $region56
        $region55: #{tpu_custom_call.1} parent=47 // pred_region
          %340 = dma.done %s333, 128
        $region56: #{tpu_custom_call.1} parent=47 // pred_fallthru
          _
        %s341 = sand.u32 %s28, 1
        %s342 = scalar_lea.sflag [#allocation6], %s341
        %s343 = sand.u32 %s88, 1
        %s344 = smul.addr %s343, 8
        %s345 = scalar_lea.vmem [#allocation7], %s344
        // Predicated region
        $region57: #{tpu_custom_call.1} parent=47 // pred_check
          %p346 = pneg %p101
        $region58: #{tpu_custom_call.1} parent=47 // pred_check_branch
          %348 = sbr.rel (%p346) target = $region60
        $region59: #{tpu_custom_call.1} parent=47 // pred_region
          %349 = dma.done %s342, 128
        $region60: #{tpu_custom_call.1} parent=47 // pred_fallthru
          _
        // Predicated region
        $region61: #{tpu_custom_call.1} parent=47 // pred_check
          %p350 = pneg %p122
        $region62: #{tpu_custom_call.1} parent=47 // pred_check_branch
          %352 = sbr.rel (%p350) target = $region64
        $region63: #{tpu_custom_call.1} parent=47 // pred_region
          %353 = dma.done [#allocation9], 1536
        $region64: #{tpu_custom_call.1} parent=47 // pred_fallthru
          _
        // Predicated region
        $region65: #{tpu_custom_call.1} parent=47 // pred_check
          %p354 = pneg %p164
        $region66: #{tpu_custom_call.1} parent=47 // pred_check_branch
          %356 = sbr.rel (%p354) target = $region68
        $region67: #{tpu_custom_call.1} parent=47 // pred_region
          %357 = dma.done [#allocation9], 512
        $region68: #{tpu_custom_call.1} parent=47 // pred_fallthru
          _
        %s358 = sand.u32 %s36, 1
        %s359 = scalar_lea.sflag [#allocation3], %s358
        %s360 = sand.u32 %s36, 1
        %s361 = smul.addr %s360, 8
        %s362 = scalar_lea.vmem [#allocation2], %s361
        %p363 = pneg %p49
        %p364 = pneg %p46
        %s365 = sand.u32 %s28, 1
        %s366 = scalar_lea.sflag [#allocation6], %s365
        %s367 = sand.u32 %s62, 1
        %s368 = smul.addr %s367, 8
        %s369 = scalar_lea.vmem [#allocation5], %s368
        %p370 = pneg %p75
        %p371 = pneg %p72
        %s372 = sand.u32 %s28, 1
        %s373 = scalar_lea.sflag [#allocation6], %s372
        %s374 = sand.u32 %s88, 1
        %s375 = smul.addr %s374, 8
        %s376 = scalar_lea.vmem [#allocation7], %s375
        %p377 = pneg %p101
        %p378 = pneg %p98
        %p379 = pneg %p122
        %p380 = pneg %p119
        %p381 = pneg %p143
        %p382 = pneg %p140
        %p383 = pneg %p164
        %p384 = pneg %p161
        %p385 = pneg %p185
        %p386 = pneg %p182
        %p387 = pneg %p211
        %p388 = pneg %p208
        %s389 = sand.u32 %s198, 1
        %s390 = scalar_lea.sflag [#allocation4], %s389
        %s391 = sand.u32 %s198, 1
        %s392 = smul.addr %s391, 8
        %s393 = scalar_lea.vmem [#allocation11], %s392
        %v394 = vld [vmem:[%s327] sm:$0xff]
        %v395 = vld [vmem:[%s336] sm:$0xff]
        %v396 = vld [vmem:[%s345] sm:$0xff]
        %v397 = vld [vmem:[#allocation8] sm:$0xff]
        %v398 = vld [vmem:[#allocation8 + $0x8] sm:$0xff]
        %v399 = vld [vmem:[#allocation8 + $0x10] sm:$0xff]
        %v400 = vld [vmem:[#allocation8 + $0x18] sm:$0xff]
        %v401 = vld [vmem:[%s4] sm:$0x1]
        %v403 = vlaneseq
        %v404 = vshrl.u32 %v403, 7
        %v405 = vsub.s32 0, %v404
        %v406 = vrot.slane %v401, %v405
        %vm408 = vcmask 261120
        %v410 = vsel %vm408, %v394, 0
        %412 = vmatprep.subr.mxu0 0.0
        %413 = vmatpush1.msra.mxu0 %v397
        %414 = vmatprep.subr.mxu0 0.0
        %415 = vmatpush1.msra.mxu0 %v398
        %416 = vmatprep.subr.mxu0 0.0
        %417 = vmatpush1.msra.mxu0 %v399
        %418 = vmatprep.subr.mxu0 0.0
        %419 = vmatpush1.msra.mxu0 %v400
        %420 = vmatprep.subr.mxu0 0.0
        %421 = vmatpush1.msra.mxu0 0.0
        %422 = vmatprep.subr.mxu0 0.0
        %423 = vmatpush1.msra.mxu0 0.0
        %424 = vmatprep.subr.mxu0 0.0
        %425 = vmatpush1.msra.mxu0 0.0
        %426 = vmatprep.subr.mxu0 0.0
        %427 = vmatpush1.msra.mxu0 0.0
        %428 = vmatprep.subr.mxu0 0.0
        %429 = vmatpush1.msra.mxu0 0.0
        %430 = vmatprep.subr.mxu0 0.0
        %431 = vmatpush1.msra.mxu0 0.0
        %432 = vmatprep.subr.mxu0 0.0
        %433 = vmatpush1.msra.mxu0 0.0
        %434 = vmatprep.subr.mxu0 0.0
        %435 = vmatpush1.msra.mxu0 0.0
        %436 = vmatprep.subr.mxu0 0.0
        %437 = vmatpush1.msra.mxu0 0.0
        %438 = vmatprep.subr.mxu0 0.0
        %439 = vmatpush1.msra.mxu0 0.0
        %440 = vmatprep.subr.mxu0 0.0
        %441 = vmatpush1.msra.mxu0 0.0
        %442 = vmatprep.subr.mxu0 0.0
        %443 = vmatpush1.msra.mxu0 0.0
        %444 = vmatprep.subr.mxu0 0.0
        %445 = vmatpush1.msra.mxu0 0.0
        %446 = vmatprep.subr.mxu0 0.0
        %447 = vmatpush1.msra.mxu0 0.0
        %448 = vmatprep.subr.mxu0 0.0
        %449 = vmatpush1.msra.mxu0 0.0
        %450 = vmatprep.subr.mxu0 0.0
        %451 = vmatpush1.msra.mxu0 0.0
        %452 = vmatprep.subr.mxu0 0.0
        %453 = vmatpush1.msra.mxu0 0.0
        %454 = vmatprep.subr.mxu0 0.0
        %455 = vmatpush1.msra.mxu0 0.0
        %456 = vmatprep.subr.mxu0 0.0
        %457 = vmatpush1.msra.mxu0 0.0
        %458 = vmatprep.subr.mxu0 0.0
        %459 = vmatpush1.msra.mxu0 0.0
        %460 = vmatprep.subr.mxu0 0.0
        %461 = vmatpush1.msra.mxu0 0.0
        %462 = vmatprep.subr.mxu0 0.0
        %463 = vmatpush1.msra.mxu0 0.0
        %464 = vmatprep.subr.mxu0 0.0
        %465 = vmatpush1.msra.mxu0 0.0
        %466 = vmatprep.subr.mxu0 0.0
        %467 = vmatpush1.msra.mxu0 0.0
        %468 = vmatprep.subr.mxu0 0.0
        %469 = vmatpush1.msra.mxu0 0.0
        %470 = vmatprep.subr.mxu0 0.0
        %471 = vmatpush1.msra.mxu0 0.0
        %472 = vmatprep.subr.mxu0 0.0
        %473 = vmatpush1.msra.mxu0 0.0
        %474 = vmatprep.subr.mxu0 0.0
        %475 = vmatpush1.msra.mxu0 0.0
        %476 = vmatprep.mubr.f32.mxu0 0.0
        %477 = vmatmul.mubr.f32.gmra.mrb[0].mxu0 %v410
        %v478 = vpop.f32.mrb[0].mxu0
        %v479 = vadd.f32 %v406, %v478
        %v480 = vpop.f32.mrb[0].mxu0
        %481 = vdwg.mxu0
        %s482 = scalar_lea.vmem [#allocation8], 32
        %v483 = vld [vmem:[%s482] sm:$0xff]
        %v484 = vld [vmem:[%s482 + $0x8] sm:$0xff]
        %v485 = vld [vmem:[%s482 + $0x10] sm:$0xff]
        %v486 = vld [vmem:[%s482 + $0x18] sm:$0xff]
        %s487 = scalar_lea.vmem %s4, 1
        %v488 = vld [vmem:[%s487] sm:$0x1]
        %v490 = vlaneseq
        %v491 = vshrl.u32 %v490, 7
        %v492 = vsub.s32 0, %v491
        %v493 = vrot.slane %v488, %v492
        %v496 = vsel %vm408, %v395, 0
        %498 = vmatprep.subr.mxu0 0.0
        %499 = vmatpush1.msra.mxu0 %v483
        %500 = vmatprep.subr.mxu0 0.0
        %501 = vmatpush1.msra.mxu0 %v484
        %502 = vmatprep.subr.mxu0 0.0
        %503 = vmatpush1.msra.mxu0 %v485
        %504 = vmatprep.subr.mxu0 0.0
        %505 = vmatpush1.msra.mxu0 %v486
        %506 = vmatprep.subr.mxu0 0.0
        %507 = vmatpush1.msra.mxu0 0.0
        %508 = vmatprep.subr.mxu0 0.0
        %509 = vmatpush1.msra.mxu0 0.0
        %510 = vmatprep.subr.mxu0 0.0
        %511 = vmatpush1.msra.mxu0 0.0
        %512 = vmatprep.subr.mxu0 0.0
        %513 = vmatpush1.msra.mxu0 0.0
        %514 = vmatprep.subr.mxu0 0.0
        %515 = vmatpush1.msra.mxu0 0.0
        %516 = vmatprep.subr.mxu0 0.0
        %517 = vmatpush1.msra.mxu0 0.0
        %518 = vmatprep.subr.mxu0 0.0
        %519 = vmatpush1.msra.mxu0 0.0
        %520 = vmatprep.subr.mxu0 0.0
        %521 = vmatpush1.msra.mxu0 0.0
        %522 = vmatprep.subr.mxu0 0.0
        %523 = vmatpush1.msra.mxu0 0.0
        %524 = vmatprep.subr.mxu0 0.0
        %525 = vmatpush1.msra.mxu0 0.0
        %526 = vmatprep.subr.mxu0 0.0
        %527 = vmatpush1.msra.mxu0 0.0
        %528 = vmatprep.subr.mxu0 0.0
        %529 = vmatpush1.msra.mxu0 0.0
        %530 = vmatprep.subr.mxu0 0.0
        %531 = vmatpush1.msra.mxu0 0.0
        %532 = vmatprep.subr.mxu0 0.0
        %533 = vmatpush1.msra.mxu0 0.0
        %534 = vmatprep.subr.mxu0 0.0
        %535 = vmatpush1.msra.mxu0 0.0
        %536 = vmatprep.subr.mxu0 0.0
        %537 = vmatpush1.msra.mxu0 0.0
        %538 = vmatprep.subr.mxu0 0.0
        %539 = vmatpush1.msra.mxu0 0.0
        %540 = vmatprep.subr.mxu0 0.0
        %541 = vmatpush1.msra.mxu0 0.0
        %542 = vmatprep.subr.mxu0 0.0
        %543 = vmatpush1.msra.mxu0 0.0
        %544 = vmatprep.subr.mxu0 0.0
        %545 = vmatpush1.msra.mxu0 0.0
        %546 = vmatprep.subr.mxu0 0.0
        %547 = vmatpush1.msra.mxu0 0.0
        %548 = vmatprep.subr.mxu0 0.0
        %549 = vmatpush1.msra.mxu0 0.0
        %550 = vmatprep.subr.mxu0 0.0
        %551 = vmatpush1.msra.mxu0 0.0
        %552 = vmatprep.subr.mxu0 0.0
        %553 = vmatpush1.msra.mxu0 0.0
        %554 = vmatprep.subr.mxu0 0.0
        %555 = vmatpush1.msra.mxu0 0.0
        %556 = vmatprep.subr.mxu0 0.0
        %557 = vmatpush1.msra.mxu0 0.0
        %558 = vmatprep.subr.mxu0 0.0
        %559 = vmatpush1.msra.mxu0 0.0
        %560 = vmatprep.subr.mxu0 0.0
        %561 = vmatpush1.msra.mxu0 0.0
        %562 = vmatprep.mubr.f32.mxu0 0.0
        %563 = vmatmul.mubr.f32.gmra.mrb[0].mxu0 %v496
        %v564 = vpop.f32.mrb[0].mxu0
        %v565 = vadd.f32 %v493, %v564
        %v566 = vpop.f32.mrb[0].mxu0
        %567 = vdwg.mxu0
        %s568 = scalar_lea.vmem [#allocation8], 64
        %v569 = vld [vmem:[%s568] sm:$0xff]
        %v570 = vld [vmem:[%s568 + $0x8] sm:$0xff]
        %v571 = vld [vmem:[%s568 + $0x10] sm:$0xff]
        %v572 = vld [vmem:[%s568 + $0x18] sm:$0xff]
        %s573 = scalar_lea.vmem %s4, 2
        %v574 = vld [vmem:[%s573] sm:$0x1]
        %v576 = vlaneseq
        %v577 = vshrl.u32 %v576, 7
        %v578 = vsub.s32 0, %v577
        %v579 = vrot.slane %v574, %v578
        %v582 = vsel %vm408, %v396, 0
        %584 = vmatprep.subr.mxu0 0.0
        %585 = vmatpush1.msra.mxu0 %v569
        %586 = vmatprep.subr.mxu0 0.0
        %587 = vmatpush1.msra.mxu0 %v570
        %588 = vmatprep.subr.mxu0 0.0
        %589 = vmatpush1.msra.mxu0 %v571
        %590 = vmatprep.subr.mxu0 0.0
        %591 = vmatpush1.msra.mxu0 %v572
        %592 = vmatprep.subr.mxu0 0.0
        %593 = vmatpush1.msra.mxu0 0.0
        %594 = vmatprep.subr.mxu0 0.0
        %595 = vmatpush1.msra.mxu0 0.0
        %596 = vmatprep.subr.mxu0 0.0
        %597 = vmatpush1.msra.mxu0 0.0
        %598 = vmatprep.subr.mxu0 0.0
        %599 = vmatpush1.msra.mxu0 0.0
        %600 = vmatprep.subr.mxu0 0.0
        %601 = vmatpush1.msra.mxu0 0.0
        %602 = vmatprep.subr.mxu0 0.0
        %603 = vmatpush1.msra.mxu0 0.0
        %604 = vmatprep.subr.mxu0 0.0
        %605 = vmatpush1.msra.mxu0 0.0
        %606 = vmatprep.subr.mxu0 0.0
        %607 = vmatpush1.msra.mxu0 0.0
        %608 = vmatprep.subr.mxu0 0.0
        %609 = vmatpush1.msra.mxu0 0.0
        %610 = vmatprep.subr.mxu0 0.0
        %611 = vmatpush1.msra.mxu0 0.0
        %612 = vmatprep.subr.mxu0 0.0
        %613 = vmatpush1.msra.mxu0 0.0
        %614 = vmatprep.subr.mxu0 0.0
        %615 = vmatpush1.msra.mxu0 0.0
        %616 = vmatprep.subr.mxu0 0.0
        %617 = vmatpush1.msra.mxu0 0.0
        %618 = vmatprep.subr.mxu0 0.0
        %619 = vmatpush1.msra.mxu0 0.0
        %620 = vmatprep.subr.mxu0 0.0
        %621 = vmatpush1.msra.mxu0 0.0
        %622 = vmatprep.subr.mxu0 0.0
        %623 = vmatpush1.msra.mxu0 0.0
        %624 = vmatprep.subr.mxu0 0.0
        %625 = vmatpush1.msra.mxu0 0.0
        %626 = vmatprep.subr.mxu0 0.0
        %627 = vmatpush1.msra.mxu0 0.0
        %628 = vmatprep.subr.mxu0 0.0
        %629 = vmatpush1.msra.mxu0 0.0
        %630 = vmatprep.subr.mxu0 0.0
        %631 = vmatpush1.msra.mxu0 0.0
        %632 = vmatprep.subr.mxu0 0.0
        %633 = vmatpush1.msra.mxu0 0.0
        %634 = vmatprep.subr.mxu0 0.0
        %635 = vmatpush1.msra.mxu0 0.0
        %636 = vmatprep.subr.mxu0 0.0
        %637 = vmatpush1.msra.mxu0 0.0
        %638 = vmatprep.subr.mxu0 0.0
        %639 = vmatpush1.msra.mxu0 0.0
        %640 = vmatprep.subr.mxu0 0.0
        %641 = vmatpush1.msra.mxu0 0.0
        %642 = vmatprep.subr.mxu0 0.0
        %643 = vmatpush1.msra.mxu0 0.0
        %644 = vmatprep.subr.mxu0 0.0
        %645 = vmatpush1.msra.mxu0 0.0
        %646 = vmatprep.subr.mxu0 0.0
        %647 = vmatpush1.msra.mxu0 0.0
        %648 = vmatprep.mubr.f32.mxu0 0.0
        %649 = vmatmul.mubr.f32.gmra.mrb[0].mxu0 %v582
        %v650 = vpop.f32.mrb[0].mxu0
        %v651 = vadd.f32 %v579, %v650
        %v652 = vpop.f32.mrb[0].mxu0
        %653 = vdwg.mxu0
        %v654 = vld [vmem:[#allocation10] sm:$0xff]
        %v655 = vld [vmem:[#allocation10 + $0x8] sm:$0xff]
        %v656 = vld [vmem:[#allocation10 + $0x10] sm:$0xff]
        %v657 = vld [vmem:[#allocation10 + $0x18] sm:$0xff]
        %vm658 = vcmask 64512
        %v660 = vsel %vm658, %v479, 0
        %v663 = vsel %vm658, %v565, 0
        %665 = vmatprep.subr.mxu0 0.0
        %666 = vmatpush1.xpose.msra.mxu0 %v663
        %667 = vmatprep.subr.mxu0 0.0
        %668 = vmatpush1.xpose.msra.mxu0 0.0
        %669 = vmatprep.subr.mxu0 0.0
        %670 = vmatpush1.xpose.msra.mxu0 0.0
        %671 = vmatprep.subr.mxu0 0.0
        %672 = vmatpush1.xpose.msra.mxu0 0.0
        %673 = vmatprep.subr.mxu0 0.0
        %674 = vmatpush1.xpose.msra.mxu0 0.0
        %675 = vmatprep.subr.mxu0 0.0
        %676 = vmatpush1.xpose.msra.mxu0 0.0
        %677 = vmatprep.subr.mxu0 0.0
        %678 = vmatpush1.xpose.msra.mxu0 0.0
        %679 = vmatprep.subr.mxu0 0.0
        %680 = vmatpush1.xpose.msra.mxu0 0.0
        %681 = vmatprep.subr.mxu0 0.0
        %682 = vmatpush1.xpose.msra.mxu0 0.0
        %683 = vmatprep.subr.mxu0 0.0
        %684 = vmatpush1.xpose.msra.mxu0 0.0
        %685 = vmatprep.subr.mxu0 0.0
        %686 = vmatpush1.xpose.msra.mxu0 0.0
        %687 = vmatprep.subr.mxu0 0.0
        %688 = vmatpush1.xpose.msra.mxu0 0.0
        %689 = vmatprep.subr.mxu0 0.0
        %690 = vmatpush1.xpose.msra.mxu0 0.0
        %691 = vmatprep.subr.mxu0 0.0
        %692 = vmatpush1.xpose.msra.mxu0 0.0
        %693 = vmatprep.subr.mxu0 0.0
        %694 = vmatpush1.xpose.msra.mxu0 0.0
        %695 = vmatprep.subr.mxu0 0.0
        %696 = vmatpush1.xpose.msra.mxu0 0.0
        %697 = vmatprep.subr.mxu0 0.0
        %698 = vmatpush1.xpose.msra.mxu0 0.0
        %699 = vmatprep.subr.mxu0 0.0
        %700 = vmatpush1.xpose.msra.mxu0 0.0
        %701 = vmatprep.subr.mxu0 0.0
        %702 = vmatpush1.xpose.msra.mxu0 0.0
        %703 = vmatprep.subr.mxu0 0.0
        %704 = vmatpush1.xpose.msra.mxu0 0.0
        %705 = vmatprep.subr.mxu0 0.0
        %706 = vmatpush1.xpose.msra.mxu0 0.0
        %707 = vmatprep.subr.mxu0 0.0
        %708 = vmatpush1.xpose.msra.mxu0 0.0
        %709 = vmatprep.subr.mxu0 0.0
        %710 = vmatpush1.xpose.msra.mxu0 0.0
        %711 = vmatprep.subr.mxu0 0.0
        %712 = vmatpush1.xpose.msra.mxu0 0.0
        %713 = vmatprep.subr.mxu0 0.0
        %714 = vmatpush1.xpose.msra.mxu0 0.0
        %715 = vmatprep.subr.mxu0 0.0
        %716 = vmatpush1.xpose.msra.mxu0 0.0
        %717 = vmatprep.subr.mxu0 0.0
        %718 = vmatpush1.xpose.msra.mxu0 0.0
        %719 = vmatprep.subr.mxu0 0.0
        %720 = vmatpush1.xpose.msra.mxu0 0.0
        %721 = vmatprep.subr.mxu0 0.0
        %722 = vmatpush1.xpose.msra.mxu0 0.0
        %723 = vmatprep.subr.mxu0 0.0
        %724 = vmatpush1.xpose.msra.mxu0 0.0
        %725 = vmatprep.subr.mxu0 0.0
        %726 = vmatpush1.xpose.msra.mxu0 0.0
        %727 = vmatprep.subr.mxu0 0.0
        %728 = vmatpush1.xpose.msra.mxu0 0.0
        %729 = vmatprep.mubr.f32.mxu0 0.0
        %730 = vmatmul.mubr.f32.gmra.mrb[0].mxu0 %v660
        %v731 = vpop.f32.mrb[0].mxu0
        %v732 = vadd.f32 0.0, %v731
        %v733 = vpop.f32.mrb[0].mxu0
        %734 = vdwg.mxu0
        %v735 = vmul.f32 %v732, 0.35355338
        %v736 = vsel %vm658, %v735, -inf
        %737 = vmax.xlane.f32.xlu0 %v736
        %v738 = vpop.xlane.xlu0 %737
        %v739 = vsub.f32 %v735, %v738
        %v740 = vmul.f32 %v739, 1.442695
        %v741 = vpow.pop %v740
        %v742 = vsel %vm658, %v741, 0.0
        %743 = vadd.xlane.f32.xlu0 %v742
        %v744 = vpop.xlane.xlu0 %743
        %v745 = vrcp.pop %v744
        %v746 = vmul.f32 %v741, %v745
        %v748 = vsel %vm658, %v746, 0
        %750 = vmatprep.subr.mxu0 0.0
        %751 = vmatpush1.msra.mxu0 %v651
        %752 = vmatprep.subr.mxu0 0.0
        %753 = vmatpush1.msra.mxu0 0.0
        %754 = vmatprep.subr.mxu0 0.0
        %755 = vmatpush1.msra.mxu0 0.0
        %756 = vmatprep.subr.mxu0 0.0
        %757 = vmatpush1.msra.mxu0 0.0
        %758 = vmatprep.subr.mxu0 0.0
        %759 = vmatpush1.msra.mxu0 0.0
        %760 = vmatprep.subr.mxu0 0.0
        %761 = vmatpush1.msra.mxu0 0.0
        %762 = vmatprep.subr.mxu0 0.0
        %763 = vmatpush1.msra.mxu0 0.0
        %764 = vmatprep.subr.mxu0 0.0
        %765 = vmatpush1.msra.mxu0 0.0
        %766 = vmatprep.subr.mxu0 0.0
        %767 = vmatpush1.msra.mxu0 0.0
        %768 = vmatprep.subr.mxu0 0.0
        %769 = vmatpush1.msra.mxu0 0.0
        %770 = vmatprep.subr.mxu0 0.0
        %771 = vmatpush1.msra.mxu0 0.0
        %772 = vmatprep.subr.mxu0 0.0
        %773 = vmatpush1.msra.mxu0 0.0
        %774 = vmatprep.subr.mxu0 0.0
        %775 = vmatpush1.msra.mxu0 0.0
        %776 = vmatprep.subr.mxu0 0.0
        %777 = vmatpush1.msra.mxu0 0.0
        %778 = vmatprep.subr.mxu0 0.0
        %779 = vmatpush1.msra.mxu0 0.0
        %780 = vmatprep.subr.mxu0 0.0
        %781 = vmatpush1.msra.mxu0 0.0
        %782 = vmatprep.subr.mxu0 0.0
        %783 = vmatpush1.msra.mxu0 0.0
        %784 = vmatprep.subr.mxu0 0.0
        %785 = vmatpush1.msra.mxu0 0.0
        %786 = vmatprep.subr.mxu0 0.0
        %787 = vmatpush1.msra.mxu0 0.0
        %788 = vmatprep.subr.mxu0 0.0
        %789 = vmatpush1.msra.mxu0 0.0
        %790 = vmatprep.subr.mxu0 0.0
        %791 = vmatpush1.msra.mxu0 0.0
        %792 = vmatprep.subr.mxu0 0.0
        %793 = vmatpush1.msra.mxu0 0.0
        %794 = vmatprep.subr.mxu0 0.0
        %795 = vmatpush1.msra.mxu0 0.0
        %796 = vmatprep.subr.mxu0 0.0
        %797 = vmatpush1.msra.mxu0 0.0
        %798 = vmatprep.subr.mxu0 0.0
        %799 = vmatpush1.msra.mxu0 0.0
        %800 = vmatprep.subr.mxu0 0.0
        %801 = vmatpush1.msra.mxu0 0.0
        %802 = vmatprep.subr.mxu0 0.0
        %803 = vmatpush1.msra.mxu0 0.0
        %804 = vmatprep.subr.mxu0 0.0
        %805 = vmatpush1.msra.mxu0 0.0
        %806 = vmatprep.subr.mxu0 0.0
        %807 = vmatpush1.msra.mxu0 0.0
        %808 = vmatprep.subr.mxu0 0.0
        %809 = vmatpush1.msra.mxu0 0.0
        %810 = vmatprep.subr.mxu0 0.0
        %811 = vmatpush1.msra.mxu0 0.0
        %812 = vmatprep.subr.mxu0 0.0
        %813 = vmatpush1.msra.mxu0 0.0
        %814 = vmatprep.mubr.f32.mxu0 0.0
        %815 = vmatmul.mubr.f32.gmra.mrb[0].mxu0 %v748
        %v816 = vpop.f32.mrb[0].mxu0
        %v817 = vadd.f32 0.0, %v816
        %v818 = vpop.f32.mrb[0].mxu0
        %819 = vdwg.mxu0
        %820 = vrot.lane.b32.xlu0 %v479, 120
        %v821 = vpop.permute.xlu0 %820
        %822 = vrot.lane.b32.xlu0 %v565, 120
        %v823 = vpop.permute.xlu0 %822
        %v824 = vsel %vm658, %v821, 0
        %v826 = vsel %vm658, %v823, 0
        %828 = vmatprep.subr.mxu0 0.0
        %829 = vmatpush1.xpose.msra.mxu0 %v826
        %830 = vmatprep.subr.mxu0 0.0
        %831 = vmatpush1.xpose.msra.mxu0 0.0
        %832 = vmatprep.subr.mxu0 0.0
        %833 = vmatpush1.xpose.msra.mxu0 0.0
        %834 = vmatprep.subr.mxu0 0.0
        %835 = vmatpush1.xpose.msra.mxu0 0.0
        %836 = vmatprep.subr.mxu0 0.0
        %837 = vmatpush1.xpose.msra.mxu0 0.0
        %838 = vmatprep.subr.mxu0 0.0
        %839 = vmatpush1.xpose.msra.mxu0 0.0
        %840 = vmatprep.subr.mxu0 0.0
        %841 = vmatpush1.xpose.msra.mxu0 0.0
        %842 = vmatprep.subr.mxu0 0.0
        %843 = vmatpush1.xpose.msra.mxu0 0.0
        %844 = vmatprep.subr.mxu0 0.0
        %845 = vmatpush1.xpose.msra.mxu0 0.0
        %846 = vmatprep.subr.mxu0 0.0
        %847 = vmatpush1.xpose.msra.mxu0 0.0
        %848 = vmatprep.subr.mxu0 0.0
        %849 = vmatpush1.xpose.msra.mxu0 0.0
        %850 = vmatprep.subr.mxu0 0.0
        %851 = vmatpush1.xpose.msra.mxu0 0.0
        %852 = vmatprep.subr.mxu0 0.0
        %853 = vmatpush1.xpose.msra.mxu0 0.0
        %854 = vmatprep.subr.mxu0 0.0
        %855 = vmatpush1.xpose.msra.mxu0 0.0
        %856 = vmatprep.subr.mxu0 0.0
        %857 = vmatpush1.xpose.msra.mxu0 0.0
        %858 = vmatprep.subr.mxu0 0.0
        %859 = vmatpush1.xpose.msra.mxu0 0.0
        %860 = vmatprep.subr.mxu0 0.0
        %861 = vmatpush1.xpose.msra.mxu0 0.0
        %862 = vmatprep.subr.mxu0 0.0
        %863 = vmatpush1.xpose.msra.mxu0 0.0
        %864 = vmatprep.subr.mxu0 0.0
        %865 = vmatpush1.xpose.msra.mxu0 0.0
        %866 = vmatprep.subr.mxu0 0.0
        %867 = vmatpush1.xpose.msra.mxu0 0.0
        %868 = vmatprep.subr.mxu0 0.0
        %869 = vmatpush1.xpose.msra.mxu0 0.0
        %870 = vmatprep.subr.mxu0 0.0
        %871 = vmatpush1.xpose.msra.mxu0 0.0
        %872 = vmatprep.subr.mxu0 0.0
        %873 = vmatpush1.xpose.msra.mxu0 0.0
        %874 = vmatprep.subr.mxu0 0.0
        %875 = vmatpush1.xpose.msra.mxu0 0.0
        %876 = vmatprep.subr.mxu0 0.0
        %877 = vmatpush1.xpose.msra.mxu0 0.0
        %878 = vmatprep.subr.mxu0 0.0
        %879 = vmatpush1.xpose.msra.mxu0 0.0
        %880 = vmatprep.subr.mxu0 0.0
        %881 = vmatpush1.xpose.msra.mxu0 0.0
        %882 = vmatprep.subr.mxu0 0.0
        %883 = vmatpush1.xpose.msra.mxu0 0.0
        %884 = vmatprep.subr.mxu0 0.0
        %885 = vmatpush1.xpose.msra.mxu0 0.0
        %886 = vmatprep.subr.mxu0 0.0
        %887 = vmatpush1.xpose.msra.mxu0 0.0
        %888 = vmatprep.subr.mxu0 0.0
        %889 = vmatpush1.xpose.msra.mxu0 0.0
        %890 = vmatprep.subr.mxu0 0.0
        %891 = vmatpush1.xpose.msra.mxu0 0.0
        %892 = vmatprep.mubr.f32.mxu0 0.0
        %893 = vmatmul.mubr.f32.gmra.mrb[0].mxu0 %v824
        %v894 = vpop.f32.mrb[0].mxu0
        %v895 = vadd.f32 0.0, %v894
        %v896 = vpop.f32.mrb[0].mxu0
        %897 = vdwg.mxu0
        %v898 = vmul.f32 %v895, 0.35355338
        %v899 = vsel %vm658, %v898, -inf
        %900 = vmax.xlane.f32.xlu0 %v899
        %v901 = vpop.xlane.xlu0 %900
        %v902 = vsub.f32 %v898, %v901
        %v903 = vmul.f32 %v902, 1.442695
        %v904 = vpow.pop %v903
        %v905 = vsel %vm658, %v904, 0.0
        %906 = vadd.xlane.f32.xlu0 %v905
        %v907 = vpop.xlane.xlu0 %906
        %v908 = vrcp.pop %v907
        %v909 = vmul.f32 %v904, %v908
        %911 = vrot.lane.b32.xlu0 %v651, 120
        %v912 = vpop.permute.xlu0 %911
        %v915 = vsel %vm658, %v909, 0
        %917 = vmatprep.subr.mxu0 0.0
        %918 = vmatpush1.msra.mxu0 %v912
        %919 = vmatprep.subr.mxu0 0.0
        %920 = vmatpush1.msra.mxu0 0.0
        %921 = vmatprep.subr.mxu0 0.0
        %922 = vmatpush1.msra.mxu0 0.0
        %923 = vmatprep.subr.mxu0 0.0
        %924 = vmatpush1.msra.mxu0 0.0
        %925 = vmatprep.subr.mxu0 0.0
        %926 = vmatpush1.msra.mxu0 0.0
        %927 = vmatprep.subr.mxu0 0.0
        %928 = vmatpush1.msra.mxu0 0.0
        %929 = vmatprep.subr.mxu0 0.0
        %930 = vmatpush1.msra.mxu0 0.0
        %931 = vmatprep.subr.mxu0 0.0
        %932 = vmatpush1.msra.mxu0 0.0
        %933 = vmatprep.subr.mxu0 0.0
        %934 = vmatpush1.msra.mxu0 0.0
        %935 = vmatprep.subr.mxu0 0.0
        %936 = vmatpush1.msra.mxu0 0.0
        %937 = vmatprep.subr.mxu0 0.0
        %938 = vmatpush1.msra.mxu0 0.0
        %939 = vmatprep.subr.mxu0 0.0
        %940 = vmatpush1.msra.mxu0 0.0
        %941 = vmatprep.subr.mxu0 0.0
        %942 = vmatpush1.msra.mxu0 0.0
        %943 = vmatprep.subr.mxu0 0.0
        %944 = vmatpush1.msra.mxu0 0.0
        %945 = vmatprep.subr.mxu0 0.0
        %946 = vmatpush1.msra.mxu0 0.0
        %947 = vmatprep.subr.mxu0 0.0
        %948 = vmatpush1.msra.mxu0 0.0
        %949 = vmatprep.subr.mxu0 0.0
        %950 = vmatpush1.msra.mxu0 0.0
        %951 = vmatprep.subr.mxu0 0.0
        %952 = vmatpush1.msra.mxu0 0.0
        %953 = vmatprep.subr.mxu0 0.0
        %954 = vmatpush1.msra.mxu0 0.0
        %955 = vmatprep.subr.mxu0 0.0
        %956 = vmatpush1.msra.mxu0 0.0
        %957 = vmatprep.subr.mxu0 0.0
        %958 = vmatpush1.msra.mxu0 0.0
        %959 = vmatprep.subr.mxu0 0.0
        %960 = vmatpush1.msra.mxu0 0.0
        %961 = vmatprep.subr.mxu0 0.0
        %962 = vmatpush1.msra.mxu0 0.0
        %963 = vmatprep.subr.mxu0 0.0
        %964 = vmatpush1.msra.mxu0 0.0
        %965 = vmatprep.subr.mxu0 0.0
        %966 = vmatpush1.msra.mxu0 0.0
        %967 = vmatprep.subr.mxu0 0.0
        %968 = vmatpush1.msra.mxu0 0.0
        %969 = vmatprep.subr.mxu0 0.0
        %970 = vmatpush1.msra.mxu0 0.0
        %971 = vmatprep.subr.mxu0 0.0
        %972 = vmatpush1.msra.mxu0 0.0
        %973 = vmatprep.subr.mxu0 0.0
        %974 = vmatpush1.msra.mxu0 0.0
        %975 = vmatprep.subr.mxu0 0.0
        %976 = vmatpush1.msra.mxu0 0.0
        %977 = vmatprep.subr.mxu0 0.0
        %978 = vmatpush1.msra.mxu0 0.0
        %979 = vmatprep.subr.mxu0 0.0
        %980 = vmatpush1.msra.mxu0 0.0
        %981 = vmatprep.mubr.f32.mxu0 0.0
        %982 = vmatmul.mubr.f32.gmra.mrb[0].mxu0 %v915
        %v983 = vpop.f32.mrb[0].mxu0
        %v984 = vadd.f32 0.0, %v983
        %v985 = vpop.f32.mrb[0].mxu0
        %986 = vdwg.mxu0
        %v988 = vsel %vm658, %v984, 0
        %990 = vmatprep.subr.mxu0 0.0
        %991 = vmatpush1.msra.mxu0 %v655
        %992 = vmatprep.subr.mxu0 0.0
        %993 = vmatpush1.msra.mxu0 0.0
        %994 = vmatprep.subr.mxu0 0.0
        %995 = vmatpush1.msra.mxu0 0.0
        %996 = vmatprep.subr.mxu0 0.0
        %997 = vmatpush1.msra.mxu0 0.0
        %998 = vmatprep.subr.mxu0 0.0
        %999 = vmatpush1.msra.mxu0 0.0
        %1000 = vmatprep.subr.mxu0 0.0
        %1001 = vmatpush1.msra.mxu0 0.0
        %1002 = vmatprep.subr.mxu0 0.0
        %1003 = vmatpush1.msra.mxu0 0.0
        %1004 = vmatprep.subr.mxu0 0.0
        %1005 = vmatpush1.msra.mxu0 0.0
        %1006 = vmatprep.subr.mxu0 0.0
        %1007 = vmatpush1.msra.mxu0 0.0
        %1008 = vmatprep.subr.mxu0 0.0
        %1009 = vmatpush1.msra.mxu0 0.0
        %1010 = vmatprep.subr.mxu0 0.0
        %1011 = vmatpush1.msra.mxu0 0.0
        %1012 = vmatprep.subr.mxu0 0.0
        %1013 = vmatpush1.msra.mxu0 0.0
        %1014 = vmatprep.subr.mxu0 0.0
        %1015 = vmatpush1.msra.mxu0 0.0
        %1016 = vmatprep.subr.mxu0 0.0
        %1017 = vmatpush1.msra.mxu0 0.0
        %1018 = vmatprep.subr.mxu0 0.0
        %1019 = vmatpush1.msra.mxu0 0.0
        %1020 = vmatprep.subr.mxu0 0.0
        %1021 = vmatpush1.msra.mxu0 0.0
        %1022 = vmatprep.subr.mxu0 0.0
        %1023 = vmatpush1.msra.mxu0 0.0
        %1024 = vmatprep.subr.mxu0 0.0
        %1025 = vmatpush1.msra.mxu0 0.0
        %1026 = vmatprep.subr.mxu0 0.0
        %1027 = vmatpush1.msra.mxu0 0.0
        %1028 = vmatprep.subr.mxu0 0.0
        %1029 = vmatpush1.msra.mxu0 0.0
        %1030 = vmatprep.subr.mxu0 0.0
        %1031 = vmatpush1.msra.mxu0 0.0
        %1032 = vmatprep.subr.mxu0 0.0
        %1033 = vmatpush1.msra.mxu0 0.0
        %1034 = vmatprep.subr.mxu0 0.0
        %1035 = vmatpush1.msra.mxu0 0.0
        %1036 = vmatprep.subr.mxu0 0.0
        %1037 = vmatpush1.msra.mxu0 0.0
        %1038 = vmatprep.subr.mxu0 0.0
        %1039 = vmatpush1.msra.mxu0 0.0
        %1040 = vmatprep.subr.mxu0 0.0
        %1041 = vmatpush1.msra.mxu0 0.0
        %1042 = vmatprep.subr.mxu0 0.0
        %1043 = vmatpush1.msra.mxu0 0.0
        %1044 = vmatprep.subr.mxu0 0.0
        %1045 = vmatpush1.msra.mxu0 0.0
        %1046 = vmatprep.subr.mxu0 0.0
        %1047 = vmatpush1.msra.mxu0 0.0
        %1048 = vmatprep.subr.mxu0 0.0
        %1049 = vmatpush1.msra.mxu0 0.0
        %1050 = vmatprep.subr.mxu0 0.0
        %1051 = vmatpush1.msra.mxu0 0.0
        %1052 = vmatprep.subr.mxu0 0.0
        %1053 = vmatpush1.msra.mxu0 0.0
        %1054 = vmatprep.mubr.f32.mxu0 0.0
        %1055 = vmatmul.mubr.f32.gmra.mrb[0].mxu0 %v988
        %v1056 = vpop.f32.mrb[0].mxu0
        %v1057 = vadd.f32 0.0, %v1056
        %v1058 = vpop.f32.mrb[0].mxu0
        %1059 = vdwg.mxu0
        %v1061 = vsel %vm658, %v817, 0
        %1063 = vmatprep.subr.mxu0 0.0
        %1064 = vmatpush1.msra.mxu0 %v654
        %1065 = vmatprep.subr.mxu0 0.0
        %1066 = vmatpush1.msra.mxu0 0.0
        %1067 = vmatprep.subr.mxu0 0.0
        %1068 = vmatpush1.msra.mxu0 0.0
        %1069 = vmatprep.subr.mxu0 0.0
        %1070 = vmatpush1.msra.mxu0 0.0
        %1071 = vmatprep.subr.mxu0 0.0
        %1072 = vmatpush1.msra.mxu0 0.0
        %1073 = vmatprep.subr.mxu0 0.0
        %1074 = vmatpush1.msra.mxu0 0.0
        %1075 = vmatprep.subr.mxu0 0.0
        %1076 = vmatpush1.msra.mxu0 0.0
        %1077 = vmatprep.subr.mxu0 0.0
        %1078 = vmatpush1.msra.mxu0 0.0
        %1079 = vmatprep.subr.mxu0 0.0
        %1080 = vmatpush1.msra.mxu0 0.0
        %1081 = vmatprep.subr.mxu0 0.0
        %1082 = vmatpush1.msra.mxu0 0.0
        %1083 = vmatprep.subr.mxu0 0.0
        %1084 = vmatpush1.msra.mxu0 0.0
        %1085 = vmatprep.subr.mxu0 0.0
        %1086 = vmatpush1.msra.mxu0 0.0
        %1087 = vmatprep.subr.mxu0 0.0
        %1088 = vmatpush1.msra.mxu0 0.0
        %1089 = vmatprep.subr.mxu0 0.0
        %1090 = vmatpush1.msra.mxu0 0.0
        %1091 = vmatprep.subr.mxu0 0.0
        %1092 = vmatpush1.msra.mxu0 0.0
        %1093 = vmatprep.subr.mxu0 0.0
        %1094 = vmatpush1.msra.mxu0 0.0
        %1095 = vmatprep.subr.mxu0 0.0
        %1096 = vmatpush1.msra.mxu0 0.0
        %1097 = vmatprep.subr.mxu0 0.0
        %1098 = vmatpush1.msra.mxu0 0.0
        %1099 = vmatprep.subr.mxu0 0.0
        %1100 = vmatpush1.msra.mxu0 0.0
        %1101 = vmatprep.subr.mxu0 0.0
        %1102 = vmatpush1.msra.mxu0 0.0
        %1103 = vmatprep.subr.mxu0 0.0
        %1104 = vmatpush1.msra.mxu0 0.0
        %1105 = vmatprep.subr.mxu0 0.0
        %1106 = vmatpush1.msra.mxu0 0.0
        %1107 = vmatprep.subr.mxu0 0.0
        %1108 = vmatpush1.msra.mxu0 0.0
        %1109 = vmatprep.subr.mxu0 0.0
        %1110 = vmatpush1.msra.mxu0 0.0
        %1111 = vmatprep.subr.mxu0 0.0
        %1112 = vmatpush1.msra.mxu0 0.0
        %1113 = vmatprep.subr.mxu0 0.0
        %1114 = vmatpush1.msra.mxu0 0.0
        %1115 = vmatprep.subr.mxu0 0.0
        %1116 = vmatpush1.msra.mxu0 0.0
        %1117 = vmatprep.subr.mxu0 0.0
        %1118 = vmatpush1.msra.mxu0 0.0
        %1119 = vmatprep.subr.mxu0 0.0
        %1120 = vmatpush1.msra.mxu0 0.0
        %1121 = vmatprep.subr.mxu0 0.0
        %1122 = vmatpush1.msra.mxu0 0.0
        %1123 = vmatprep.subr.mxu0 0.0
        %1124 = vmatpush1.msra.mxu0 0.0
        %1125 = vmatprep.subr.mxu0 0.0
        %1126 = vmatpush1.msra.mxu0 0.0
        %1127 = vmatprep.mubr.f32.mxu0 0.0
        %1128 = vmatmul.mubr.f32.gmra.mrb[0].mxu0 %v1061
        %v1129 = vpop.f32.mrb[0].mxu0
        %v1130 = vadd.f32 %v1057, %v1129
        %v1131 = vpop.f32.mrb[0].mxu0
        %1132 = vdwg.mxu0
        %1133 = vrot.lane.b32.xlu0 %v479, 112
        %v1134 = vpop.permute.xlu0 %1133
        %1135 = vrot.lane.b32.xlu0 %v565, 112
        %v1136 = vpop.permute.xlu0 %1135
        %v1137 = vsel %vm658, %v1134, 0
        %v1139 = vsel %vm658, %v1136, 0
        %1141 = vmatprep.subr.mxu0 0.0
        %1142 = vmatpush1.xpose.msra.mxu0 %v1139
        %1143 = vmatprep.subr.mxu0 0.0
        %1144 = vmatpush1.xpose.msra.mxu0 0.0
        %1145 = vmatprep.subr.mxu0 0.0
        %1146 = vmatpush1.xpose.msra.mxu0 0.0
        %1147 = vmatprep.subr.mxu0 0.0
        %1148 = vmatpush1.xpose.msra.mxu0 0.0
        %1149 = vmatprep.subr.mxu0 0.0
        %1150 = vmatpush1.xpose.msra.mxu0 0.0
        %1151 = vmatprep.subr.mxu0 0.0
        %1152 = vmatpush1.xpose.msra.mxu0 0.0
        %1153 = vmatprep.subr.mxu0 0.0
        %1154 = vmatpush1.xpose.msra.mxu0 0.0
        %1155 = vmatprep.subr.mxu0 0.0
        %1156 = vmatpush1.xpose.msra.mxu0 0.0
        %1157 = vmatprep.subr.mxu0 0.0
        %1158 = vmatpush1.xpose.msra.mxu0 0.0
        %1159 = vmatprep.subr.mxu0 0.0
        %1160 = vmatpush1.xpose.msra.mxu0 0.0
        %1161 = vmatprep.subr.mxu0 0.0
        %1162 = vmatpush1.xpose.msra.mxu0 0.0
        %1163 = vmatprep.subr.mxu0 0.0
        %1164 = vmatpush1.xpose.msra.mxu0 0.0
        %1165 = vmatprep.subr.mxu0 0.0
        %1166 = vmatpush1.xpose.msra.mxu0 0.0
        %1167 = vmatprep.subr.mxu0 0.0
        %1168 = vmatpush1.xpose.msra.mxu0 0.0
        %1169 = vmatprep.subr.mxu0 0.0
        %1170 = vmatpush1.xpose.msra.mxu0 0.0
        %1171 = vmatprep.subr.mxu0 0.0
        %1172 = vmatpush1.xpose.msra.mxu0 0.0
        %1173 = vmatprep.subr.mxu0 0.0
        %1174 = vmatpush1.xpose.msra.mxu0 0.0
        %1175 = vmatprep.subr.mxu0 0.0
        %1176 = vmatpush1.xpose.msra.mxu0 0.0
        %1177 = vmatprep.subr.mxu0 0.0
        %1178 = vmatpush1.xpose.msra.mxu0 0.0
        %1179 = vmatprep.subr.mxu0 0.0
        %1180 = vmatpush1.xpose.msra.mxu0 0.0
        %1181 = vmatprep.subr.mxu0 0.0
        %1182 = vmatpush1.xpose.msra.mxu0 0.0
        %1183 = vmatprep.subr.mxu0 0.0
        %1184 = vmatpush1.xpose.msra.mxu0 0.0
        %1185 = vmatprep.subr.mxu0 0.0
        %1186 = vmatpush1.xpose.msra.mxu0 0.0
        %1187 = vmatprep.subr.mxu0 0.0
        %1188 = vmatpush1.xpose.msra.mxu0 0.0
        %1189 = vmatprep.subr.mxu0 0.0
        %1190 = vmatpush1.xpose.msra.mxu0 0.0
        %1191 = vmatprep.subr.mxu0 0.0
        %1192 = vmatpush1.xpose.msra.mxu0 0.0
        %1193 = vmatprep.subr.mxu0 0.0
        %1194 = vmatpush1.xpose.msra.mxu0 0.0
        %1195 = vmatprep.subr.mxu0 0.0
        %1196 = vmatpush1.xpose.msra.mxu0 0.0
        %1197 = vmatprep.subr.mxu0 0.0
        %1198 = vmatpush1.xpose.msra.mxu0 0.0
        %1199 = vmatprep.subr.mxu0 0.0
        %1200 = vmatpush1.xpose.msra.mxu0 0.0
        %1201 = vmatprep.subr.mxu0 0.0
        %1202 = vmatpush1.xpose.msra.mxu0 0.0
        %1203 = vmatprep.subr.mxu0 0.0
        %1204 = vmatpush1.xpose.msra.mxu0 0.0
        %1205 = vmatprep.mubr.f32.mxu0 0.0
        %1206 = vmatmul.mubr.f32.gmra.mrb[0].mxu0 %v1137
        %v1207 = vpop.f32.mrb[0].mxu0
        %v1208 = vadd.f32 0.0, %v1207
        %v1209 = vpop.f32.mrb[0].mxu0
        %1210 = vdwg.mxu0
        %v1211 = vmul.f32 %v1208, 0.35355338
        %v1212 = vsel %vm658, %v1211, -inf
        %1213 = vmax.xlane.f32.xlu0 %v1212
        %v1214 = vpop.xlane.xlu0 %1213
        %v1215 = vsub.f32 %v1211, %v1214
        %v1216 = vmul.f32 %v1215, 1.442695
        %v1217 = vpow.pop %v1216
        %v1218 = vsel %vm658, %v1217, 0.0
        %1219 = vadd.xlane.f32.xlu0 %v1218
        %v1220 = vpop.xlane.xlu0 %1219
        %v1221 = vrcp.pop %v1220
        %v1222 = vmul.f32 %v1217, %v1221
        %1223 = vrot.lane.b32.xlu0 %v651, 112
        %v1224 = vpop.permute.xlu0 %1223
        %v1227 = vsel %vm658, %v1222, 0
        %1229 = vmatprep.subr.mxu0 0.0
        %1230 = vmatpush1.msra.mxu0 %v1224
        %1231 = vmatprep.subr.mxu0 0.0
        %1232 = vmatpush1.msra.mxu0 0.0
        %1233 = vmatprep.subr.mxu0 0.0
        %1234 = vmatpush1.msra.mxu0 0.0
        %1235 = vmatprep.subr.mxu0 0.0
        %1236 = vmatpush1.msra.mxu0 0.0
        %1237 = vmatprep.subr.mxu0 0.0
        %1238 = vmatpush1.msra.mxu0 0.0
        %1239 = vmatprep.subr.mxu0 0.0
        %1240 = vmatpush1.msra.mxu0 0.0
        %1241 = vmatprep.subr.mxu0 0.0
        %1242 = vmatpush1.msra.mxu0 0.0
        %1243 = vmatprep.subr.mxu0 0.0
        %1244 = vmatpush1.msra.mxu0 0.0
        %1245 = vmatprep.subr.mxu0 0.0
        %1246 = vmatpush1.msra.mxu0 0.0
        %1247 = vmatprep.subr.mxu0 0.0
        %1248 = vmatpush1.msra.mxu0 0.0
        %1249 = vmatprep.subr.mxu0 0.0
        %1250 = vmatpush1.msra.mxu0 0.0
        %1251 = vmatprep.subr.mxu0 0.0
        %1252 = vmatpush1.msra.mxu0 0.0
        %1253 = vmatprep.subr.mxu0 0.0
        %1254 = vmatpush1.msra.mxu0 0.0
        %1255 = vmatprep.subr.mxu0 0.0
        %1256 = vmatpush1.msra.mxu0 0.0
        %1257 = vmatprep.subr.mxu0 0.0
        %1258 = vmatpush1.msra.mxu0 0.0
        %1259 = vmatprep.subr.mxu0 0.0
        %1260 = vmatpush1.msra.mxu0 0.0
        %1261 = vmatprep.subr.mxu0 0.0
        %1262 = vmatpush1.msra.mxu0 0.0
        %1263 = vmatprep.subr.mxu0 0.0
        %1264 = vmatpush1.msra.mxu0 0.0
        %1265 = vmatprep.subr.mxu0 0.0
        %1266 = vmatpush1.msra.mxu0 0.0
        %1267 = vmatprep.subr.mxu0 0.0
        %1268 = vmatpush1.msra.mxu0 0.0
        %1269 = vmatprep.subr.mxu0 0.0
        %1270 = vmatpush1.msra.mxu0 0.0
        %1271 = vmatprep.subr.mxu0 0.0
        %1272 = vmatpush1.msra.mxu0 0.0
        %1273 = vmatprep.subr.mxu0 0.0
        %1274 = vmatpush1.msra.mxu0 0.0
        %1275 = vmatprep.subr.mxu0 0.0
        %1276 = vmatpush1.msra.mxu0 0.0
        %1277 = vmatprep.subr.mxu0 0.0
        %1278 = vmatpush1.msra.mxu0 0.0
        %1279 = vmatprep.subr.mxu0 0.0
        %1280 = vmatpush1.msra.mxu0 0.0
        %1281 = vmatprep.subr.mxu0 0.0
        %1282 = vmatpush1.msra.mxu0 0.0
        %1283 = vmatprep.subr.mxu0 0.0
        %1284 = vmatpush1.msra.mxu0 0.0
        %1285 = vmatprep.subr.mxu0 0.0
        %1286 = vmatpush1.msra.mxu0 0.0
        %1287 = vmatprep.subr.mxu0 0.0
        %1288 = vmatpush1.msra.mxu0 0.0
        %1289 = vmatprep.subr.mxu0 0.0
        %1290 = vmatpush1.msra.mxu0 0.0
        %1291 = vmatprep.subr.mxu0 0.0
        %1292 = vmatpush1.msra.mxu0 0.0
        %1293 = vmatprep.mubr.f32.mxu0 0.0
        %1294 = vmatmul.mubr.f32.gmra.mrb[0].mxu0 %v1227
        %v1295 = vpop.f32.mrb[0].mxu0
        %v1296 = vadd.f32 0.0, %v1295
        %v1297 = vpop.f32.mrb[0].mxu0
        %1298 = vdwg.mxu0
        %v1300 = vsel %vm658, %v1296, 0
        %1302 = vmatprep.subr.mxu0 0.0
        %1303 = vmatpush1.msra.mxu0 %v656
        %1304 = vmatprep.subr.mxu0 0.0
        %1305 = vmatpush1.msra.mxu0 0.0
        %1306 = vmatprep.subr.mxu0 0.0
        %1307 = vmatpush1.msra.mxu0 0.0
        %1308 = vmatprep.subr.mxu0 0.0
        %1309 = vmatpush1.msra.mxu0 0.0
        %1310 = vmatprep.subr.mxu0 0.0
        %1311 = vmatpush1.msra.mxu0 0.0
        %1312 = vmatprep.subr.mxu0 0.0
        %1313 = vmatpush1.msra.mxu0 0.0
        %1314 = vmatprep.subr.mxu0 0.0
        %1315 = vmatpush1.msra.mxu0 0.0
        %1316 = vmatprep.subr.mxu0 0.0
        %1317 = vmatpush1.msra.mxu0 0.0
        %1318 = vmatprep.subr.mxu0 0.0
        %1319 = vmatpush1.msra.mxu0 0.0
        %1320 = vmatprep.subr.mxu0 0.0
        %1321 = vmatpush1.msra.mxu0 0.0
        %1322 = vmatprep.subr.mxu0 0.0
        %1323 = vmatpush1.msra.mxu0 0.0
        %1324 = vmatprep.subr.mxu0 0.0
        %1325 = vmatpush1.msra.mxu0 0.0
        %1326 = vmatprep.subr.mxu0 0.0
        %1327 = vmatpush1.msra.mxu0 0.0
        %1328 = vmatprep.subr.mxu0 0.0
        %1329 = vmatpush1.msra.mxu0 0.0
        %1330 = vmatprep.subr.mxu0 0.0
        %1331 = vmatpush1.msra.mxu0 0.0
        %1332 = vmatprep.subr.mxu0 0.0
        %1333 = vmatpush1.msra.mxu0 0.0
        %1334 = vmatprep.subr.mxu0 0.0
        %1335 = vmatpush1.msra.mxu0 0.0
        %1336 = vmatprep.subr.mxu0 0.0
        %1337 = vmatpush1.msra.mxu0 0.0
        %1338 = vmatprep.subr.mxu0 0.0
        %1339 = vmatpush1.msra.mxu0 0.0
        %1340 = vmatprep.subr.mxu0 0.0
        %1341 = vmatpush1.msra.mxu0 0.0
        %1342 = vmatprep.subr.mxu0 0.0
        %1343 = vmatpush1.msra.mxu0 0.0
        %1344 = vmatprep.subr.mxu0 0.0
        %1345 = vmatpush1.msra.mxu0 0.0
        %1346 = vmatprep.subr.mxu0 0.0
        %1347 = vmatpush1.msra.mxu0 0.0
        %1348 = vmatprep.subr.mxu0 0.0
        %1349 = vmatpush1.msra.mxu0 0.0
        %1350 = vmatprep.subr.mxu0 0.0
        %1351 = vmatpush1.msra.mxu0 0.0
        %1352 = vmatprep.subr.mxu0 0.0
        %1353 = vmatpush1.msra.mxu0 0.0
        %1354 = vmatprep.subr.mxu0 0.0
        %1355 = vmatpush1.msra.mxu0 0.0
        %1356 = vmatprep.subr.mxu0 0.0
        %1357 = vmatpush1.msra.mxu0 0.0
        %1358 = vmatprep.subr.mxu0 0.0
        %1359 = vmatpush1.msra.mxu0 0.0
        %1360 = vmatprep.subr.mxu0 0.0
        %1361 = vmatpush1.msra.mxu0 0.0
        %1362 = vmatprep.subr.mxu0 0.0
        %1363 = vmatpush1.msra.mxu0 0.0
        %1364 = vmatprep.subr.mxu0 0.0
        %1365 = vmatpush1.msra.mxu0 0.0
        %1366 = vmatprep.mubr.f32.mxu0 0.0
        %1367 = vmatmul.mubr.f32.gmra.mrb[0].mxu0 %v1300
        %v1368 = vpop.f32.mrb[0].mxu0
        %v1369 = vadd.f32 0.0, %v1368
        %v1370 = vpop.f32.mrb[0].mxu0
        %1371 = vdwg.mxu0
        %v1372 = vadd.f32 %v1130, %v1369
        %1373 = vrot.lane.b32.xlu0 %v479, 104
        %v1374 = vpop.permute.xlu0 %1373
        %1375 = vrot.lane.b32.xlu0 %v565, 104
        %v1376 = vpop.permute.xlu0 %1375
        %v1377 = vsel %vm658, %v1374, 0
        %v1379 = vsel %vm658, %v1376, 0
        %1381 = vmatprep.subr.mxu0 0.0
        %1382 = vmatpush1.xpose.msra.mxu0 %v1379
        %1383 = vmatprep.subr.mxu0 0.0
        %1384 = vmatpush1.xpose.msra.mxu0 0.0
        %1385 = vmatprep.subr.mxu0 0.0
        %1386 = vmatpush1.xpose.msra.mxu0 0.0
        %1387 = vmatprep.subr.mxu0 0.0
        %1388 = vmatpush1.xpose.msra.mxu0 0.0
        %1389 = vmatprep.subr.mxu0 0.0
        %1390 = vmatpush1.xpose.msra.mxu0 0.0
        %1391 = vmatprep.subr.mxu0 0.0
        %1392 = vmatpush1.xpose.msra.mxu0 0.0
        %1393 = vmatprep.subr.mxu0 0.0
        %1394 = vmatpush1.xpose.msra.mxu0 0.0
        %1395 = vmatprep.subr.mxu0 0.0
        %1396 = vmatpush1.xpose.msra.mxu0 0.0
        %1397 = vmatprep.subr.mxu0 0.0
        %1398 = vmatpush1.xpose.msra.mxu0 0.0
        %1399 = vmatprep.subr.mxu0 0.0
        %1400 = vmatpush1.xpose.msra.mxu0 0.0
        %1401 = vmatprep.subr.mxu0 0.0
        %1402 = vmatpush1.xpose.msra.mxu0 0.0
        %1403 = vmatprep.subr.mxu0 0.0
        %1404 = vmatpush1.xpose.msra.mxu0 0.0
        %1405 = vmatprep.subr.mxu0 0.0
        %1406 = vmatpush1.xpose.msra.mxu0 0.0
        %1407 = vmatprep.subr.mxu0 0.0
        %1408 = vmatpush1.xpose.msra.mxu0 0.0
        %1409 = vmatprep.subr.mxu0 0.0
        %1410 = vmatpush1.xpose.msra.mxu0 0.0
        %1411 = vmatprep.subr.mxu0 0.0
        %1412 = vmatpush1.xpose.msra.mxu0 0.0
        %1413 = vmatprep.subr.mxu0 0.0
        %1414 = vmatpush1.xpose.msra.mxu0 0.0
        %1415 = vmatprep.subr.mxu0 0.0
        %1416 = vmatpush1.xpose.msra.mxu0 0.0
        %1417 = vmatprep.subr.mxu0 0.0
        %1418 = vmatpush1.xpose.msra.mxu0 0.0
        %1419 = vmatprep.subr.mxu0 0.0
        %1420 = vmatpush1.xpose.msra.mxu0 0.0
        %1421 = vmatprep.subr.mxu0 0.0
        %1422 = vmatpush1.xpose.msra.mxu0 0.0
        %1423 = vmatprep.subr.mxu0 0.0
        %1424 = vmatpush1.xpose.msra.mxu0 0.0
        %1425 = vmatprep.subr.mxu0 0.0
        %1426 = vmatpush1.xpose.msra.mxu0 0.0
        %1427 = vmatprep.subr.mxu0 0.0
        %1428 = vmatpush1.xpose.msra.mxu0 0.0
        %1429 = vmatprep.subr.mxu0 0.0
        %1430 = vmatpush1.xpose.msra.mxu0 0.0
        %1431 = vmatprep.subr.mxu0 0.0
        %1432 = vmatpush1.xpose.msra.mxu0 0.0
        %1433 = vmatprep.subr.mxu0 0.0
        %1434 = vmatpush1.xpose.msra.mxu0 0.0
        %1435 = vmatprep.subr.mxu0 0.0
        %1436 = vmatpush1.xpose.msra.mxu0 0.0
        %1437 = vmatprep.subr.mxu0 0.0
        %1438 = vmatpush1.xpose.msra.mxu0 0.0
        %1439 = vmatprep.subr.mxu0 0.0
        %1440 = vmatpush1.xpose.msra.mxu0 0.0
        %1441 = vmatprep.subr.mxu0 0.0
        %1442 = vmatpush1.xpose.msra.mxu0 0.0
        %1443 = vmatprep.subr.mxu0 0.0
        %1444 = vmatpush1.xpose.msra.mxu0 0.0
        %1445 = vmatprep.mubr.f32.mxu0 0.0
        %1446 = vmatmul.mubr.f32.gmra.mrb[0].mxu0 %v1377
        %v1447 = vpop.f32.mrb[0].mxu0
        %v1448 = vadd.f32 0.0, %v1447
        %v1449 = vpop.f32.mrb[0].mxu0
        %1450 = vdwg.mxu0
        %v1451 = vmul.f32 %v1448, 0.35355338
        %v1452 = vsel %vm658, %v1451, -inf
        %1453 = vmax.xlane.f32.xlu0 %v1452
        %v1454 = vpop.xlane.xlu0 %1453
        %v1455 = vsub.f32 %v1451, %v1454
        %v1456 = vmul.f32 %v1455, 1.442695
        %v1457 = vpow.pop %v1456
        %v1458 = vsel %vm658, %v1457, 0.0
        %1459 = vadd.xlane.f32.xlu0 %v1458
        %v1460 = vpop.xlane.xlu0 %1459
        %v1461 = vrcp.pop %v1460
        %v1462 = vmul.f32 %v1457, %v1461
        %1463 = vrot.lane.b32.xlu0 %v651, 104
        %v1464 = vpop.permute.xlu0 %1463
        %v1467 = vsel %vm658, %v1462, 0
        %1469 = vmatprep.subr.mxu0 0.0
        %1470 = vmatpush1.msra.mxu0 %v1464
        %1471 = vmatprep.subr.mxu0 0.0
        %1472 = vmatpush1.msra.mxu0 0.0
        %1473 = vmatprep.subr.mxu0 0.0
        %1474 = vmatpush1.msra.mxu0 0.0
        %1475 = vmatprep.subr.mxu0 0.0
        %1476 = vmatpush1.msra.mxu0 0.0
        %1477 = vmatprep.subr.mxu0 0.0
        %1478 = vmatpush1.msra.mxu0 0.0
        %1479 = vmatprep.subr.mxu0 0.0
        %1480 = vmatpush1.msra.mxu0 0.0
        %1481 = vmatprep.subr.mxu0 0.0
        %1482 = vmatpush1.msra.mxu0 0.0
        %1483 = vmatprep.subr.mxu0 0.0
        %1484 = vmatpush1.msra.mxu0 0.0
        %1485 = vmatprep.subr.mxu0 0.0
        %1486 = vmatpush1.msra.mxu0 0.0
        %1487 = vmatprep.subr.mxu0 0.0
        %1488 = vmatpush1.msra.mxu0 0.0
        %1489 = vmatprep.subr.mxu0 0.0
        %1490 = vmatpush1.msra.mxu0 0.0
        %1491 = vmatprep.subr.mxu0 0.0
        %1492 = vmatpush1.msra.mxu0 0.0
        %1493 = vmatprep.subr.mxu0 0.0
        %1494 = vmatpush1.msra.mxu0 0.0
        %1495 = vmatprep.subr.mxu0 0.0
        %1496 = vmatpush1.msra.mxu0 0.0
        %1497 = vmatprep.subr.mxu0 0.0
        %1498 = vmatpush1.msra.mxu0 0.0
        %1499 = vmatprep.subr.mxu0 0.0
        %1500 = vmatpush1.msra.mxu0 0.0
        %1501 = vmatprep.subr.mxu0 0.0
        %1502 = vmatpush1.msra.mxu0 0.0
        %1503 = vmatprep.subr.mxu0 0.0
        %1504 = vmatpush1.msra.mxu0 0.0
        %1505 = vmatprep.subr.mxu0 0.0
        %1506 = vmatpush1.msra.mxu0 0.0
        %1507 = vmatprep.subr.mxu0 0.0
        %1508 = vmatpush1.msra.mxu0 0.0
        %1509 = vmatprep.subr.mxu0 0.0
        %1510 = vmatpush1.msra.mxu0 0.0
        %1511 = vmatprep.subr.mxu0 0.0
        %1512 = vmatpush1.msra.mxu0 0.0
        %1513 = vmatprep.subr.mxu0 0.0
        %1514 = vmatpush1.msra.mxu0 0.0
        %1515 = vmatprep.subr.mxu0 0.0
        %1516 = vmatpush1.msra.mxu0 0.0
        %1517 = vmatprep.subr.mxu0 0.0
        %1518 = vmatpush1.msra.mxu0 0.0
        %1519 = vmatprep.subr.mxu0 0.0
        %1520 = vmatpush1.msra.mxu0 0.0
        %1521 = vmatprep.subr.mxu0 0.0
        %1522 = vmatpush1.msra.mxu0 0.0
        %1523 = vmatprep.subr.mxu0 0.0
        %1524 = vmatpush1.msra.mxu0 0.0
        %1525 = vmatprep.subr.mxu0 0.0
        %1526 = vmatpush1.msra.mxu0 0.0
        %1527 = vmatprep.subr.mxu0 0.0
        %1528 = vmatpush1.msra.mxu0 0.0
        %1529 = vmatprep.subr.mxu0 0.0
        %1530 = vmatpush1.msra.mxu0 0.0
        %1531 = vmatprep.subr.mxu0 0.0
        %1532 = vmatpush1.msra.mxu0 0.0
        %1533 = vmatprep.mubr.f32.mxu0 0.0
        %1534 = vmatmul.mubr.f32.gmra.mrb[0].mxu0 %v1467
        %v1535 = vpop.f32.mrb[0].mxu0
        %v1536 = vadd.f32 0.0, %v1535
        %v1537 = vpop.f32.mrb[0].mxu0
        %1538 = vdwg.mxu0
        %v1540 = vsel %vm658, %v1536, 0
        %1542 = vmatprep.subr.mxu0 0.0
        %1543 = vmatpush1.msra.mxu0 %v657
        %1544 = vmatprep.subr.mxu0 0.0
        %1545 = vmatpush1.msra.mxu0 0.0
        %1546 = vmatprep.subr.mxu0 0.0
        %1547 = vmatpush1.msra.mxu0 0.0
        %1548 = vmatprep.subr.mxu0 0.0
        %1549 = vmatpush1.msra.mxu0 0.0
        %1550 = vmatprep.subr.mxu0 0.0
        %1551 = vmatpush1.msra.mxu0 0.0
        %1552 = vmatprep.subr.mxu0 0.0
        %1553 = vmatpush1.msra.mxu0 0.0
        %1554 = vmatprep.subr.mxu0 0.0
        %1555 = vmatpush1.msra.mxu0 0.0
        %1556 = vmatprep.subr.mxu0 0.0
        %1557 = vmatpush1.msra.mxu0 0.0
        %1558 = vmatprep.subr.mxu0 0.0
        %1559 = vmatpush1.msra.mxu0 0.0
        %1560 = vmatprep.subr.mxu0 0.0
        %1561 = vmatpush1.msra.mxu0 0.0
        %1562 = vmatprep.subr.mxu0 0.0
        %1563 = vmatpush1.msra.mxu0 0.0
        %1564 = vmatprep.subr.mxu0 0.0
        %1565 = vmatpush1.msra.mxu0 0.0
        %1566 = vmatprep.subr.mxu0 0.0
        %1567 = vmatpush1.msra.mxu0 0.0
        %1568 = vmatprep.subr.mxu0 0.0
        %1569 = vmatpush1.msra.mxu0 0.0
        %1570 = vmatprep.subr.mxu0 0.0
        %1571 = vmatpush1.msra.mxu0 0.0
        %1572 = vmatprep.subr.mxu0 0.0
        %1573 = vmatpush1.msra.mxu0 0.0
        %1574 = vmatprep.subr.mxu0 0.0
        %1575 = vmatpush1.msra.mxu0 0.0
        %1576 = vmatprep.subr.mxu0 0.0
        %1577 = vmatpush1.msra.mxu0 0.0
        %1578 = vmatprep.subr.mxu0 0.0
        %1579 = vmatpush1.msra.mxu0 0.0
        %1580 = vmatprep.subr.mxu0 0.0
        %1581 = vmatpush1.msra.mxu0 0.0
        %1582 = vmatprep.subr.mxu0 0.0
        %1583 = vmatpush1.msra.mxu0 0.0
        %1584 = vmatprep.subr.mxu0 0.0
        %1585 = vmatpush1.msra.mxu0 0.0
        %1586 = vmatprep.subr.mxu0 0.0
        %1587 = vmatpush1.msra.mxu0 0.0
        %1588 = vmatprep.subr.mxu0 0.0
        %1589 = vmatpush1.msra.mxu0 0.0
        %1590 = vmatprep.subr.mxu0 0.0
        %1591 = vmatpush1.msra.mxu0 0.0
        %1592 = vmatprep.subr.mxu0 0.0
        %1593 = vmatpush1.msra.mxu0 0.0
        %1594 = vmatprep.subr.mxu0 0.0
        %1595 = vmatpush1.msra.mxu0 0.0
        %1596 = vmatprep.subr.mxu0 0.0
        %1597 = vmatpush1.msra.mxu0 0.0
        %1598 = vmatprep.subr.mxu0 0.0
        %1599 = vmatpush1.msra.mxu0 0.0
        %1600 = vmatprep.subr.mxu0 0.0
        %1601 = vmatpush1.msra.mxu0 0.0
        %1602 = vmatprep.subr.mxu0 0.0
        %1603 = vmatpush1.msra.mxu0 0.0
        %1604 = vmatprep.subr.mxu0 0.0
        %1605 = vmatpush1.msra.mxu0 0.0
        %1606 = vmatprep.mubr.f32.mxu0 0.0
        %1607 = vmatmul.mubr.f32.gmra.mrb[0].mxu0 %v1540
        %v1608 = vpop.f32.mrb[0].mxu0
        %v1609 = vadd.f32 0.0, %v1608
        %v1610 = vpop.f32.mrb[0].mxu0
        %1611 = vdwg.mxu0
        %v1612 = vadd.f32 %v1372, %v1609
        %v1613 = vld [vmem:[%s6] sm:$0x1]
        %v1615 = vlaneseq
        %v1616 = vshrl.u32 %v1615, 7
        %v1617 = vsub.s32 0, %v1616
        %v1618 = vrot.slane %v1613, %v1617
        %v1620 = vadd.f32 %v1612, %v1618
        %1621 = vst.msk [vmem:[%s393] sm:$0xff] %vm408, %v1620
        %s1622 = sand.u32 %s198, 1
        %s1623 = scalar_lea.sflag [#allocation4], %s1622
        %s1624 = sand.u32 %s198, 1
        %s1625 = smul.addr %s1624, 8
        %s1626 = scalar_lea.vmem [#allocation11], %s1625
        // Predicated region
        $region69: #{tpu_custom_call.1} parent=47 // pred_check
          %p1627 = pneg %p208
        $region70: #{tpu_custom_call.1} parent=47 // pred_check_branch
          %1629 = sbr.rel (%p1627) target = $region72
        $region71: #{tpu_custom_call.1} parent=47 // pred_region
          %s1631 = ssub.s32 128, 128
          %1632 = vsyncadd %s1623, %s1631
          %s1633 = smul.addr %s28, 128
          %s1634 = scalar_lea.hbm %s7, %s1633
          %s1636 = sshll.u32 %s1626, 4
          %s1637 = int_to_ptr.vmem [resolvable:$true] %s1636
          %1639 = dma.vmem_to_hbm [thread:$0]  %s1637, 128, %s1634, %s1623
        $region72: #{tpu_custom_call.1} parent=47 // pred_fallthru
          _
      $region48: #{tpu_custom_call.1} parent=5 // pred_fallthru
        _
      %p1640 = scmp.le.s32.totalorder 2, %s23
      // Predicated region
      $region73: #{tpu_custom_call.1} parent=5 // pred_check
        %p1641 = pneg %p1640
      $region74: #{tpu_custom_call.1} parent=5 // pred_check_branch
        %1643 = sbr.rel (%p1641) target = $region76
      $region75: #{tpu_custom_call.1} parent=5 // pred_region
        %s1644 = ssub.s32 %s23, 2
        // Predicated region
        $region77: #{tpu_custom_call.1} parent=75 // pred_check
          %p1645 = pneg %p214
        $region78: #{tpu_custom_call.1} parent=75 // pred_check_branch
          %1647 = sbr.rel (%p1645) target = $region80
        $region79: #{tpu_custom_call.1} parent=75 // pred_region
          %s1648 = sand.u32 %s199, 1
          %s1649 = scalar_lea.sflag [#allocation4], %s1648
          %s1650 = sand.u32 %s199, 1
          %s1651 = smul.addr %s1650, 8
          %s1652 = scalar_lea.vmem [#allocation11], %s1651
          %1653 = dma.done %s1649, 128
        $region80: #{tpu_custom_call.1} parent=75 // pred_fallthru
          _
      $region76: #{tpu_custom_call.1} parent=5 // pred_fallthru
        _
    $region6: #{tpu_custom_call.1} parent=1 // loop_footer
      %s27 = sadd.s32 1, %s23
    $region7: #{tpu_custom_call.1} parent=1 // loop_footer_branch
      %22 = sbr.rel target = $region3
    $region8: #{tpu_custom_call.1} parent=1 // loop_exit
      _
    %1654 = vsyncpa [#allocation3], 1
    %s1655 = scalar_lea.sflag [#allocation3], 1
    %1656 = vsyncpa %s1655, 1
    %1657 = vsyncpa [#allocation6], 1
    %s1658 = scalar_lea.sflag [#allocation6], 1
    %1659 = vsyncpa %s1658, 1
    %1660 = vsyncpa [#allocation9], 1
    %1661 = vsyncpa [#allocation4], 1
    %s1662 = scalar_lea.sflag [#allocation4], 1
    %1663 = vsyncpa %s1662, 1

</llo_original>
